<compile_context>
chip_gen: v6e
topology: v6e:2x2x1
jax: 0.10.0
libtpu: 0.0.40
codegen_flags: <defaults>
</compile_context>

<pallas_src>
import functools

import jax
import jax.numpy as jnp
from jax.experimental import pallas as pl
from jax.experimental.pallas import tpu as pltpu


def _lstm_kernel(*refs, hidden_dim, num_layers, seq_len, batch_block):
    """refs = (x, [wih_T, whh_T, b] * num_layers, fc_w_T, fc_b, out, xw, seq).

    Gate columns are pre-permuted to [i, f, o, g].
    """
    H = hidden_dim
    T = seq_len
    Bb = batch_block                    # batch rows handled by this grid step

    n_in = 1 + 3 * num_layers + 2
    x_ref = refs[0]                     # (T*Bb, D)          time-major rows
    fcw_ref = refs[n_in - 2]            # (H, out_dim)
    fcb_ref = refs[n_in - 1]            # (1, out_dim) f32
    out_ref = refs[n_in]                # (Bb, out_dim)
    xw_ref = refs[n_in + 1]             # (T*Bb, 4H) f32 scratch: X @ W_ih + b
    seq_ref = refs[n_in + 2]            # (T*Bb, H)  compute-dtype scratch

    unroll = T if T <= 16 else 4

    h_last = None
    for layer in range(num_layers):
        wih = refs[1 + 3 * layer][...]  # (D_in, 4H)  compute dtype
        whh = refs[2 + 3 * layer][...]  # (H,    4H)  compute dtype
        b = refs[3 + 3 * layer][...]    # (1,    4H)  f32 (b_ih + b_hh)

        # ---- Hoisted input projection: one big matmul per layer, bias folded
        # in here so nothing but `+ row` remains on the serial chain.
        if layer == 0:
            layer_in = x_ref[...]
        else:
            layer_in = seq_ref[...]
        xw_ref[...] = (
            jnp.dot(layer_in, wih, preferred_element_type=jnp.float32) + b
        )

        # ---- Serial recurrence over time (only h @ W_hh + elementwise left).
        # TODO(synk): on v5e/v6e, hold W_hh resident in the MXU across the
        # time loop via pltpu.matmul_push_rhs / matmul_acc_lhs / matmul_pop.
        def step(t, carry):
            h, c = carry
            row0 = pl.multiple_of(t * Bb, 8)      # Bb is a multiple of 8
            gates = xw_ref[pl.ds(row0, Bb), :] + jnp.dot(
                h.astype(whh.dtype), whh, preferred_element_type=jnp.float32
            )
            # Gate order [i, f, o, g]: sigmoid only on the first 3H columns,
            # tanh only on the last H columns (half the EUP work per step).
            sig = jax.nn.sigmoid(gates[:, 0:3 * H])
            g_g = jnp.tanh(gates[:, 3 * H:4 * H])
            i_g = sig[:, 0 * H:1 * H]
            f_g = sig[:, 1 * H:2 * H]
            o_g = sig[:, 2 * H:3 * H]
            c_new = f_g * c + i_g * g_g
            h_new = o_g * jnp.tanh(c_new)
            # Feeds next layer's projection; stored in compute dtype.
            seq_ref[pl.ds(row0, Bb), :] = h_new.astype(seq_ref.dtype)
            return h_new, c_new

        h0 = jnp.zeros((Bb, H), jnp.float32)
        c0 = jnp.zeros((Bb, H), jnp.float32)
        h_last, _ = jax.lax.fori_loop(0, T, step, (h0, c0), unroll=unroll)

    # Final linear layer on the last timestep's hidden state (top layer).
    # TODO(synk): pad out_dim to a lane-dense multiple of 128 for large output
    # widths; negligible at out_dim=4.
    out_ref[...] = (
        jnp.dot(h_last.astype(fcw_ref.dtype), fcw_ref[...],
                preferred_element_type=jnp.float32)
        + fcb_ref[...]
    ).astype(out_ref.dtype)


def _permute_gate_cols(arr, H):
    """Reorder the trailing 4H axis from PyTorch's [i,f,g,o] to [i,f,o,g]."""
    i = arr[..., 0 * H:1 * H]
    f = arr[..., 1 * H:2 * H]
    g = arr[..., 2 * H:3 * H]
    o = arr[..., 3 * H:4 * H]
    return jnp.concatenate([i, f, o, g], axis=-1)


def lstm_forward(x, layer_params, fc_w_t, fc_b, *, hidden_dim, num_layers,
                 batch_blocks=None, compute_dtype=jnp.float32):
    """x: (B, T, D) float32. layer_params: list of (wih_T, whh_T, bias_2d)
    in standard PyTorch gate order [i, f, g, o] (transposed weights).

    compute_dtype: dtype of matmul operands (jnp.bfloat16 recommended on
    v5e/v6e/v7x for MXU throughput + VMEM; accumulation / gate math stay f32).
    """
    B, T, D = x.shape
    H = hidden_dim
    out_dim = fc_b.shape[-1]

    # Pad batch to a multiple of 8 rows so every per-timestep pl.ds access is
    # sublane-tile aligned (padded rows are independent and sliced off below).
    B_pad = ((B + 7) // 8) * 8
    if B_pad != B:
        x = jnp.pad(x, ((0, B_pad - B), (0, 0), (0, 0)))

    # Batch-group grid: independent sequences, marked "parallel" so a 2-TC
    # chip (v7x) can shard them.  Only split when each group keeps >= 8 rows;
    # otherwise one well-shaped group beats two starved GEMVs.
    if batch_blocks is None:
        batch_blocks = 2 if (B_pad >= 16 and B_pad % 16 == 0) else 1
    G = batch_blocks
    assert B_pad % G == 0
    Bb = B_pad // G
    assert Bb % 8 == 0, "per-group batch rows must be a multiple of 8"

    # Group batch rows and lay each group out time-major so timestep t of a
    # group occupies contiguous rows [t*Bb, (t+1)*Bb).
    # TODO(synk): for large B*T*D, keep x batch-major and index xw as
    # (Bb, T, 4H) instead of paying this extra HBM round trip.
    x_g = jnp.transpose(x.reshape(G, Bb, T, D), (0, 2, 1, 3)).reshape(G, T * Bb, D)
    x_g = x_g.astype(compute_dtype)

    flat_inputs = [x_g]
    in_specs = [pl.BlockSpec((None, T * Bb, D), lambda g: (g, 0, 0))]
    # TODO(synk): weights are grid-invariant; skip double-buffering them
    # (pipeline_mode=pl.Buffered(1)) or stream per-layer via a grid axis for
    # deep/wide models on v7x's 64 MiB VMEM.
    for (wih_t, whh_t, bias) in layer_params:
        wih_c = _permute_gate_cols(wih_t, H).astype(compute_dtype)
        whh_c = _permute_gate_cols(whh_t, H).astype(compute_dtype)
        bias_c = _permute_gate_cols(bias, H).astype(jnp.float32)
        flat_inputs += [wih_c, whh_c, bias_c]
        in_specs += [
            pl.BlockSpec(wih_c.shape, lambda g: (0, 0)),
            pl.BlockSpec(whh_c.shape, lambda g: (0, 0)),
            pl.BlockSpec(bias_c.shape, lambda g: (0, 0)),
        ]
    fc_w_c = fc_w_t.astype(compute_dtype)
    fc_b_c = fc_b.astype(jnp.float32)
    flat_inputs += [fc_w_c, fc_b_c]
    in_specs += [
        pl.BlockSpec(fc_w_c.shape, lambda g: (0, 0)),
        pl.BlockSpec(fc_b_c.shape, lambda g: (0, 0)),
    ]

    kernel = functools.partial(
        _lstm_kernel,
        hidden_dim=hidden_dim,
        num_layers=num_layers,
        seq_len=T,
        batch_block=Bb,
    )

    # Footprint-based VMEM limit (clamped so it also fits a v7x TensorCore).
    c_size = jnp.dtype(compute_dtype).itemsize
    xw_bytes = T * Bb * 4 * H * 4
    seq_bytes = T * Bb * H * c_size
    x_bytes = 2 * T * Bb * D * c_size            # double-buffered input block
    w_bytes = 0
    for (wih_t, whh_t, bias) in layer_params:
        w_bytes += (wih_t.size + whh_t.size) * c_size + bias.size * 4
    w_bytes += fc_w_c.size * c_size + fc_b_c.size * 4
    w_bytes *= 2                                  # default double-buffering
    out_bytes = 2 * Bb * out_dim * 4
    needed = xw_bytes + seq_bytes + x_bytes + w_bytes + out_bytes
    vmem_limit = int(min(max(32 * 1024 * 1024, needed + 8 * 1024 * 1024),
                         64 * 1024 * 1024))

    # TODO(synk): for long T, chunk the hoisted projection over time so the
    # (T*Bb, 4H) xw scratch stays bounded on v7x.
    out_g = pl.pallas_call(
        kernel,
        grid=(G,),
        out_shape=jax.ShapeDtypeStruct((G, Bb, out_dim), jnp.float32),
        in_specs=in_specs,
        out_specs=pl.BlockSpec((None, Bb, out_dim), lambda g: (g, 0, 0)),
        scratch_shapes=[
            pltpu.VMEM((T * Bb, 4 * H), jnp.float32),   # hoisted X@W_ih + b
            pltpu.VMEM((T * Bb, H), compute_dtype),     # per-layer hidden seq
        ],
        compiler_params=pltpu.CompilerParams(
            dimension_semantics=("parallel",),
            vmem_limit_bytes=vmem_limit,
        ),
    )(*flat_inputs)

    return out_g.reshape(B_pad, out_dim)[:B]


def _reference_forward(x, layer_params, fc_w_t, fc_b, *, hidden_dim, num_layers):
    """Pure-JAX reference with PyTorch gate order [i,f,g,o] (for validation)."""
    B, T, _ = x.shape
    H = hidden_dim
    seq = [x[:, t, :] for t in range(T)]
    for layer in range(num_layers):
        wih_t, whh_t, bias = layer_params[layer]
        h = jnp.zeros((B, H), jnp.float32)
        c = jnp.zeros((B, H), jnp.float32)
        outs = []
        for t in range(T):
            gates = seq[t] @ wih_t + h @ whh_t + bias
            i_g = jax.nn.sigmoid(gates[:, 0 * H:1 * H])
            f_g = jax.nn.sigmoid(gates[:, 1 * H:2 * H])
            g_g = jnp.tanh(gates[:, 2 * H:3 * H])
            o_g = jax.nn.sigmoid(gates[:, 3 * H:4 * H])
            c = f_g * c + i_g * g_g
            h = o_g * jnp.tanh(c)
            outs.append(h)
        seq = outs
    return seq[-1] @ fc_w_t + fc_b


if __name__ == "__main__":
    # Small shapes consistent with the module's forward.
    B, T = 2, 8
    input_dim, hidden_dim, num_layers, output_dim = 8, 32, 2, 4

    key = jax.random.PRNGKey(0)
    k_x, key = jax.random.split(key)
    x = jax.random.normal(k_x, (B, T, input_dim), dtype=jnp.float32)

    # PyTorch-style init: uniform(-1/sqrt(H), 1/sqrt(H)).
    bound = 1.0 / (hidden_dim ** 0.5)

    layer_params = []
    for layer in range(num_layers):
        d_in = input_dim if layer == 0 else hidden_dim
        key, k1, k2, k3, k4 = jax.random.split(key, 5)
        w_ih = jax.random.uniform(k1, (4 * hidden_dim, d_in), jnp.float32, -bound, bound)
        w_hh = jax.random.uniform(k2, (4 * hidden_dim, hidden_dim), jnp.float32, -bound, bound)
        b_ih = jax.random.uniform(k3, (4 * hidden_dim,), jnp.float32, -bound, bound)
        b_hh = jax.random.uniform(k4, (4 * hidden_dim,), jnp.float32, -bound, bound)
        # Store transposed + combined bias (kept 2D for TPU layout), PyTorch
        # gate order [i,f,g,o]; the wrapper permutes to [i,f,o,g] internally.
        layer_params.append(
            (w_ih.T, w_hh.T, (b_ih + b_hh).reshape(1, 4 * hidden_dim))
        )

    key, k5, k6 = jax.random.split(key, 3)
    fc_bound = 1.0 / (hidden_dim ** 0.5)
    fc_w = jax.random.uniform(k5, (output_dim, hidden_dim), jnp.float32, -fc_bound, fc_bound)
    fc_b = jax.random.uniform(k6, (output_dim,), jnp.float32, -fc_bound, fc_bound)
    fc_w_t = fc_w.T
    fc_b2d = fc_b.reshape(1, output_dim)

    # Exact-validation path (f32 matmul operands).
    out = lstm_forward(
        x, layer_params, fc_w_t, fc_b2d,
        hidden_dim=hidden_dim, num_layers=num_layers,
    )
    out = jax.block_until_ready(out)

    ref = _reference_forward(
        x, layer_params, fc_w_t, fc_b2d,
        hidden_dim=hidden_dim, num_layers=num_layers,
    )
    assert out.shape == (B, output_dim)
    assert jnp.allclose(out, ref, atol=1e-4, rtol=1e-4), (
        f"max abs err = {jnp.max(jnp.abs(out - ref))}"
    )

    # Performance path (bf16 matmul operands, f32 gate/state math); looser
    # tolerance is expected precision loss, not a bug.
    out_bf16 = lstm_forward(
        x, layer_params, fc_w_t, fc_b2d,
        hidden_dim=hidden_dim, num_layers=num_layers,
        compute_dtype=jnp.bfloat16,
    )
    out_bf16 = jax.block_until_ready(out_bf16)
    assert jnp.allclose(out_bf16, ref, atol=1e-1, rtol=1e-1), (
        f"bf16 max abs err = {jnp.max(jnp.abs(out_bf16 - ref))}"
    )

    print("KERNEL_OK")
</pallas_src>

<mosaic_0001>
module attributes {stable_mosaic.version = 11 : i64} {
  func.func @_lstm_kernel(%arg0: i32, %arg1: memref<1x64x8xf32, #tpu.memory_space<vmem>>, %arg2: memref<8x128xf32, #tpu.memory_space<vmem>>, %arg3: memref<32x128xf32, #tpu.memory_space<vmem>>, %arg4: memref<1x128xf32, #tpu.memory_space<vmem>>, %arg5: memref<32x128xf32, #tpu.memory_space<vmem>>, %arg6: memref<32x128xf32, #tpu.memory_space<vmem>>, %arg7: memref<1x128xf32, #tpu.memory_space<vmem>>, %arg8: memref<32x4xf32, #tpu.memory_space<vmem>>, %arg9: memref<1x4xf32, #tpu.memory_space<vmem>>, %arg10: memref<1x8x4xf32, #tpu.memory_space<vmem>>, %arg11: memref<64x128xf32, #tpu.memory_space<vmem>>, %arg12: memref<64x32xf32, #tpu.memory_space<vmem>>) attributes {dimension_semantics = [#tpu.dimension_semantics<parallel>], iteration_bounds = array<i64: 1>, scalar_prefetch = 0 : i64, scratch_operands = 2 : i64, tpu.core_type = #tpu.core_type<tc>, window_params = [{transform_indices = @transform_0, window_bounds = array<i64: 1, 64, 8>}, {pipeline_mode = #tpu.pipeline_mode<synchronous>, transform_indices = @transform_1, window_bounds = array<i64: 8, 128>}, {pipeline_mode = #tpu.pipeline_mode<synchronous>, transform_indices = @transform_2, window_bounds = array<i64: 32, 128>}, {pipeline_mode = #tpu.pipeline_mode<synchronous>, transform_indices = @transform_3, window_bounds = array<i64: 1, 128>}, {pipeline_mode = #tpu.pipeline_mode<synchronous>, transform_indices = @transform_4, window_bounds = array<i64: 32, 128>}, {pipeline_mode = #tpu.pipeline_mode<synchronous>, transform_indices = @transform_5, window_bounds = array<i64: 32, 128>}, {pipeline_mode = #tpu.pipeline_mode<synchronous>, transform_indices = @transform_6, window_bounds = array<i64: 1, 128>}, {pipeline_mode = #tpu.pipeline_mode<synchronous>, transform_indices = @transform_7, window_bounds = array<i64: 32, 4>}, {pipeline_mode = #tpu.pipeline_mode<synchronous>, transform_indices = @transform_8, window_bounds = array<i64: 1, 4>}, {transform_indices = @transform_9, window_bounds = array<i64: 1, 8, 4>}]} {
    %c0 = arith.constant 0 : index
    %c0_0 = arith.constant 0 : index
    %0 = vector.load %arg2[%c0, %c0_0] : memref<8x128xf32, #tpu.memory_space<vmem>>, vector<8x128xf32>
    %c0_1 = arith.constant 0 : index
    %c0_2 = arith.constant 0 : index
    %1 = vector.load %arg3[%c0_1, %c0_2] : memref<32x128xf32, #tpu.memory_space<vmem>>, vector<32x128xf32>
    %c0_3 = arith.constant 0 : index
    %c0_4 = arith.constant 0 : index
    %2 = vector.load %arg4[%c0_3, %c0_4] : memref<1x128xf32, #tpu.memory_space<vmem>>, vector<1x128xf32>
    %c0_5 = arith.constant 0 : index
    %c0_6 = arith.constant 0 : index
    %c0_7 = arith.constant 0 : index
    %3 = vector.load %arg1[%c0_5, %c0_6, %c0_7] : memref<1x64x8xf32, #tpu.memory_space<vmem>>, vector<1x64x8xf32>
    %4 = vector.shape_cast %3 : vector<1x64x8xf32> to vector<64x8xf32>
    %cst = arith.constant dense<0.000000e+00> : vector<64x128xf32>
    %5 = tpu.matmul %4, %0, %cst {dimension_numbers = #tpu.dot_dimension_numbers<[1], [0], [0], [1], [0, 0, 1, 1], [], []>} : vector<64x8xf32>, vector<8x128xf32>, vector<64x128xf32> -> vector<64x128xf32>
    %6 = vector.broadcast %2 : vector<1x128xf32> to vector<64x128xf32>
    %7 = arith.addf %5, %6 : vector<64x128xf32>
    %c0_8 = arith.constant 0 : index
    %c0_9 = arith.constant 0 : index
    %8 = vector.load %arg11[%c0_8, %c0_9] : memref<64x128xf32, #tpu.memory_space<vmem>>, vector<64x128xf32>
    tpu.vector_store %arg11[%c0_8, %c0_9], %7 {strides = array<i32>} : memref<64x128xf32, #tpu.memory_space<vmem>>, vector<64x128xf32>,
    %cst_10 = arith.constant 0.000000e+00 : f32
    %9 = vector.broadcast %cst_10 : f32 to vector<8x32xf32>
    %cst_11 = arith.constant 0.000000e+00 : f32
    %10 = vector.broadcast %cst_11 : f32 to vector<8x32xf32>
    %c0_i32 = arith.constant 0 : i32
    %c8_i32 = arith.constant 8 : i32
    %11 = arith.muli %c0_i32, %c8_i32 : i32
    %12 = tpu.assume_multiple %11, 8 : i32
    %13 = arith.index_cast %12 : i32 to index
    %c0_12 = arith.constant 0 : index
    %14 = vector.load %arg11[%13, %c0_12] : memref<64x128xf32, #tpu.memory_space<vmem>>, vector<8x128xf32>
    %cst_13 = arith.constant dense<0.000000e+00> : vector<8x128xf32>
    %15 = tpu.matmul %9, %1, %cst_13 {dimension_numbers = #tpu.dot_dimension_numbers<[1], [0], [0], [1], [0, 0, 1, 1], [], []>} : vector<8x32xf32>, vector<32x128xf32>, vector<8x128xf32> -> vector<8x128xf32>
    %16 = arith.addf %14, %15 : vector<8x128xf32>
    %17 = vector.extract_strided_slice %16 {offsets = [0, 0], sizes = [8, 96], strides = [1, 1]} : vector<8x128xf32> to vector<8x96xf32>
    %18 = arith.negf %17 : vector<8x96xf32>
    %19 = math.exp %18 : vector<8x96xf32>
    %cst_14 = arith.constant 1.000000e+00 : f32
    %20 = vector.broadcast %cst_14 : f32 to vector<8x96xf32>
    %21 = arith.addf %20, %19 : vector<8x96xf32>
    %22 = arith.divf %20, %21 : vector<8x96xf32>
    %23 = vector.extract_strided_slice %16 {offsets = [0, 96], sizes = [8, 32], strides = [1, 1]} : vector<8x128xf32> to vector<8x32xf32>
    %24 = math.tanh %23 : vector<8x32xf32>
    %25 = vector.extract_strided_slice %22 {offsets = [0, 0], sizes = [8, 32], strides = [1, 1]} : vector<8x96xf32> to vector<8x32xf32>
    %26 = vector.extract_strided_slice %22 {offsets = [0, 32], sizes = [8, 32], strides = [1, 1]} : vector<8x96xf32> to vector<8x32xf32>
    %27 = vector.extract_strided_slice %22 {offsets = [0, 64], sizes = [8, 32], strides = [1, 1]} : vector<8x96xf32> to vector<8x32xf32>
    %28 = arith.mulf %26, %10 : vector<8x32xf32>
    %29 = arith.mulf %25, %24 : vector<8x32xf32>
    %30 = arith.addf %28, %29 : vector<8x32xf32>
    %31 = math.tanh %30 : vector<8x32xf32>
    %32 = arith.mulf %27, %31 : vector<8x32xf32>
    %33 = arith.index_cast %12 : i32 to index
    %c0_15 = arith.constant 0 : index
    %34 = vector.load %arg12[%33, %c0_15] : memref<64x32xf32, #tpu.memory_space<vmem>>, vector<8x32xf32>
    tpu.vector_store %arg12[%33, %c0_15], %32 {strides = array<i32>} : memref<64x32xf32, #tpu.memory_space<vmem>>, vector<8x32xf32>,
    %c1_i32 = arith.constant 1 : i32
    %c8_i32_16 = arith.constant 8 : i32
    %35 = arith.muli %c1_i32, %c8_i32_16 : i32
    %36 = tpu.assume_multiple %35, 8 : i32
    %37 = arith.index_cast %36 : i32 to index
    %c0_17 = arith.constant 0 : index
    %38 = vector.load %arg11[%37, %c0_17] : memref<64x128xf32, #tpu.memory_space<vmem>>, vector<8x128xf32>
    %cst_18 = arith.constant dense<0.000000e+00> : vector<8x128xf32>
    %39 = tpu.matmul %32, %1, %cst_18 {dimension_numbers = #tpu.dot_dimension_numbers<[1], [0], [0], [1], [0, 0, 1, 1], [], []>} : vector<8x32xf32>, vector<32x128xf32>, vector<8x128xf32> -> vector<8x128xf32>
    %40 = arith.addf %38, %39 : vector<8x128xf32>
    %41 = vector.extract_strided_slice %40 {offsets = [0, 0], sizes = [8, 96], strides = [1, 1]} : vector<8x128xf32> to vector<8x96xf32>
    %42 = arith.negf %41 : vector<8x96xf32>
    %43 = math.exp %42 : vector<8x96xf32>
    %cst_19 = arith.constant 1.000000e+00 : f32
    %44 = vector.broadcast %cst_19 : f32 to vector<8x96xf32>
    %45 = arith.addf %44, %43 : vector<8x96xf32>
    %46 = arith.divf %44, %45 : vector<8x96xf32>
    %47 = vector.extract_strided_slice %40 {offsets = [0, 96], sizes = [8, 32], strides = [1, 1]} : vector<8x128xf32> to vector<8x32xf32>
    %48 = math.tanh %47 : vector<8x32xf32>
    %49 = vector.extract_strided_slice %46 {offsets = [0, 0], sizes = [8, 32], strides = [1, 1]} : vector<8x96xf32> to vector<8x32xf32>
    %50 = vector.extract_strided_slice %46 {offsets = [0, 32], sizes = [8, 32], strides = [1, 1]} : vector<8x96xf32> to vector<8x32xf32>
    %51 = vector.extract_strided_slice %46 {offsets = [0, 64], sizes = [8, 32], strides = [1, 1]} : vector<8x96xf32> to vector<8x32xf32>
    %52 = arith.mulf %50, %30 : vector<8x32xf32>
    %53 = arith.mulf %49, %48 : vector<8x32xf32>
    %54 = arith.addf %52, %53 : vector<8x32xf32>
    %55 = math.tanh %54 : vector<8x32xf32>
    %56 = arith.mulf %51, %55 : vector<8x32xf32>
    %57 = arith.index_cast %36 : i32 to index
    %c0_20 = arith.constant 0 : index
    %58 = vector.load %arg12[%57, %c0_20] : memref<64x32xf32, #tpu.memory_space<vmem>>, vector<8x32xf32>
    tpu.vector_store %arg12[%57, %c0_20], %56 {strides = array<i32>} : memref<64x32xf32, #tpu.memory_space<vmem>>, vector<8x32xf32>,
    %c2_i32 = arith.constant 2 : i32
    %c8_i32_21 = arith.constant 8 : i32
    %59 = arith.muli %c2_i32, %c8_i32_21 : i32
    %60 = tpu.assume_multiple %59, 8 : i32
    %61 = arith.index_cast %60 : i32 to index
    %c0_22 = arith.constant 0 : index
    %62 = vector.load %arg11[%61, %c0_22] : memref<64x128xf32, #tpu.memory_space<vmem>>, vector<8x128xf32>
    %cst_23 = arith.constant dense<0.000000e+00> : vector<8x128xf32>
    %63 = tpu.matmul %56, %1, %cst_23 {dimension_numbers = #tpu.dot_dimension_numbers<[1], [0], [0], [1], [0, 0, 1, 1], [], []>} : vector<8x32xf32>, vector<32x128xf32>, vector<8x128xf32> -> vector<8x128xf32>
    %64 = arith.addf %62, %63 : vector<8x128xf32>
    %65 = vector.extract_strided_slice %64 {offsets = [0, 0], sizes = [8, 96], strides = [1, 1]} : vector<8x128xf32> to vector<8x96xf32>
    %66 = arith.negf %65 : vector<8x96xf32>
    %67 = math.exp %66 : vector<8x96xf32>
    %cst_24 = arith.constant 1.000000e+00 : f32
    %68 = vector.broadcast %cst_24 : f32 to vector<8x96xf32>
    %69 = arith.addf %68, %67 : vector<8x96xf32>
    %70 = arith.divf %68, %69 : vector<8x96xf32>
    %71 = vector.extract_strided_slice %64 {offsets = [0, 96], sizes = [8, 32], strides = [1, 1]} : vector<8x128xf32> to vector<8x32xf32>
    %72 = math.tanh %71 : vector<8x32xf32>
    %73 = vector.extract_strided_slice %70 {offsets = [0, 0], sizes = [8, 32], strides = [1, 1]} : vector<8x96xf32> to vector<8x32xf32>
    %74 = vector.extract_strided_slice %70 {offsets = [0, 32], sizes = [8, 32], strides = [1, 1]} : vector<8x96xf32> to vector<8x32xf32>
    %75 = vector.extract_strided_slice %70 {offsets = [0, 64], sizes = [8, 32], strides = [1, 1]} : vector<8x96xf32> to vector<8x32xf32>
    %76 = arith.mulf %74, %54 : vector<8x32xf32>
    %77 = arith.mulf %73, %72 : vector<8x32xf32>
    %78 = arith.addf %76, %77 : vector<8x32xf32>
    %79 = math.tanh %78 : vector<8x32xf32>
    %80 = arith.mulf %75, %79 : vector<8x32xf32>
    %81 = arith.index_cast %60 : i32 to index
    %c0_25 = arith.constant 0 : index
    %82 = vector.load %arg12[%81, %c0_25] : memref<64x32xf32, #tpu.memory_space<vmem>>, vector<8x32xf32>
    tpu.vector_store %arg12[%81, %c0_25], %80 {strides = array<i32>} : memref<64x32xf32, #tpu.memory_space<vmem>>, vector<8x32xf32>,
    %c3_i32 = arith.constant 3 : i32
    %c8_i32_26 = arith.constant 8 : i32
    %83 = arith.muli %c3_i32, %c8_i32_26 : i32
    %84 = tpu.assume_multiple %83, 8 : i32
    %85 = arith.index_cast %84 : i32 to index
    %c0_27 = arith.constant 0 : index
    %86 = vector.load %arg11[%85, %c0_27] : memref<64x128xf32, #tpu.memory_space<vmem>>, vector<8x128xf32>
    %cst_28 = arith.constant dense<0.000000e+00> : vector<8x128xf32>
    %87 = tpu.matmul %80, %1, %cst_28 {dimension_numbers = #tpu.dot_dimension_numbers<[1], [0], [0], [1], [0, 0, 1, 1], [], []>} : vector<8x32xf32>, vector<32x128xf32>, vector<8x128xf32> -> vector<8x128xf32>
    %88 = arith.addf %86, %87 : vector<8x128xf32>
    %89 = vector.extract_strided_slice %88 {offsets = [0, 0], sizes = [8, 96], strides = [1, 1]} : vector<8x128xf32> to vector<8x96xf32>
    %90 = arith.negf %89 : vector<8x96xf32>
    %91 = math.exp %90 : vector<8x96xf32>
    %cst_29 = arith.constant 1.000000e+00 : f32
    %92 = vector.broadcast %cst_29 : f32 to vector<8x96xf32>
    %93 = arith.addf %92, %91 : vector<8x96xf32>
    %94 = arith.divf %92, %93 : vector<8x96xf32>
    %95 = vector.extract_strided_slice %88 {offsets = [0, 96], sizes = [8, 32], strides = [1, 1]} : vector<8x128xf32> to vector<8x32xf32>
    %96 = math.tanh %95 : vector<8x32xf32>
    %97 = vector.extract_strided_slice %94 {offsets = [0, 0], sizes = [8, 32], strides = [1, 1]} : vector<8x96xf32> to vector<8x32xf32>
    %98 = vector.extract_strided_slice %94 {offsets = [0, 32], sizes = [8, 32], strides = [1, 1]} : vector<8x96xf32> to vector<8x32xf32>
    %99 = vector.extract_strided_slice %94 {offsets = [0, 64], sizes = [8, 32], strides = [1, 1]} : vector<8x96xf32> to vector<8x32xf32>
    %100 = arith.mulf %98, %78 : vector<8x32xf32>
    %101 = arith.mulf %97, %96 : vector<8x32xf32>
    %102 = arith.addf %100, %101 : vector<8x32xf32>
    %103 = math.tanh %102 : vector<8x32xf32>
    %104 = arith.mulf %99, %103 : vector<8x32xf32>
    %105 = arith.index_cast %84 : i32 to index
    %c0_30 = arith.constant 0 : index
    %106 = vector.load %arg12[%105, %c0_30] : memref<64x32xf32, #tpu.memory_space<vmem>>, vector<8x32xf32>
    tpu.vector_store %arg12[%105, %c0_30], %104 {strides = array<i32>} : memref<64x32xf32, #tpu.memory_space<vmem>>, vector<8x32xf32>,
    %c4_i32 = arith.constant 4 : i32
    %c8_i32_31 = arith.constant 8 : i32
    %107 = arith.muli %c4_i32, %c8_i32_31 : i32
    %108 = tpu.assume_multiple %107, 8 : i32
    %109 = arith.index_cast %108 : i32 to index
    %c0_32 = arith.constant 0 : index
    %110 = vector.load %arg11[%109, %c0_32] : memref<64x128xf32, #tpu.memory_space<vmem>>, vector<8x128xf32>
    %cst_33 = arith.constant dense<0.000000e+00> : vector<8x128xf32>
    %111 = tpu.matmul %104, %1, %cst_33 {dimension_numbers = #tpu.dot_dimension_numbers<[1], [0], [0], [1], [0, 0, 1, 1], [], []>} : vector<8x32xf32>, vector<32x128xf32>, vector<8x128xf32> -> vector<8x128xf32>
    %112 = arith.addf %110, %111 : vector<8x128xf32>
    %113 = vector.extract_strided_slice %112 {offsets = [0, 0], sizes = [8, 96], strides = [1, 1]} : vector<8x128xf32> to vector<8x96xf32>
    %114 = arith.negf %113 : vector<8x96xf32>
    %115 = math.exp %114 : vector<8x96xf32>
    %cst_34 = arith.constant 1.000000e+00 : f32
    %116 = vector.broadcast %cst_34 : f32 to vector<8x96xf32>
    %117 = arith.addf %116, %115 : vector<8x96xf32>
    %118 = arith.divf %116, %117 : vector<8x96xf32>
    %119 = vector.extract_strided_slice %112 {offsets = [0, 96], sizes = [8, 32], strides = [1, 1]} : vector<8x128xf32> to vector<8x32xf32>
    %120 = math.tanh %119 : vector<8x32xf32>
    %121 = vector.extract_strided_slice %118 {offsets = [0, 0], sizes = [8, 32], strides = [1, 1]} : vector<8x96xf32> to vector<8x32xf32>
    %122 = vector.extract_strided_slice %118 {offsets = [0, 32], sizes = [8, 32], strides = [1, 1]} : vector<8x96xf32> to vector<8x32xf32>
    %123 = vector.extract_strided_slice %118 {offsets = [0, 64], sizes = [8, 32], strides = [1, 1]} : vector<8x96xf32> to vector<8x32xf32>
    %124 = arith.mulf %122, %102 : vector<8x32xf32>
    %125 = arith.mulf %121, %120 : vector<8x32xf32>
    %126 = arith.addf %124, %125 : vector<8x32xf32>
    %127 = math.tanh %126 : vector<8x32xf32>
    %128 = arith.mulf %123, %127 : vector<8x32xf32>
    %129 = arith.index_cast %108 : i32 to index
    %c0_35 = arith.constant 0 : index
    %130 = vector.load %arg12[%129, %c0_35] : memref<64x32xf32, #tpu.memory_space<vmem>>, vector<8x32xf32>
    tpu.vector_store %arg12[%129, %c0_35], %128 {strides = array<i32>} : memref<64x32xf32, #tpu.memory_space<vmem>>, vector<8x32xf32>,
    %c5_i32 = arith.constant 5 : i32
    %c8_i32_36 = arith.constant 8 : i32
    %131 = arith.muli %c5_i32, %c8_i32_36 : i32
    %132 = tpu.assume_multiple %131, 8 : i32
    %133 = arith.index_cast %132 : i32 to index
    %c0_37 = arith.constant 0 : index
    %134 = vector.load %arg11[%133, %c0_37] : memref<64x128xf32, #tpu.memory_space<vmem>>, vector<8x128xf32>
    %cst_38 = arith.constant dense<0.000000e+00> : vector<8x128xf32>
    %135 = tpu.matmul %128, %1, %cst_38 {dimension_numbers = #tpu.dot_dimension_numbers<[1], [0], [0], [1], [0, 0, 1, 1], [], []>} : vector<8x32xf32>, vector<32x128xf32>, vector<8x128xf32> -> vector<8x128xf32>
    %136 = arith.addf %134, %135 : vector<8x128xf32>
    %137 = vector.extract_strided_slice %136 {offsets = [0, 0], sizes = [8, 96], strides = [1, 1]} : vector<8x128xf32> to vector<8x96xf32>
    %138 = arith.negf %137 : vector<8x96xf32>
    %139 = math.exp %138 : vector<8x96xf32>
    %cst_39 = arith.constant 1.000000e+00 : f32
    %140 = vector.broadcast %cst_39 : f32 to vector<8x96xf32>
    %141 = arith.addf %140, %139 : vector<8x96xf32>
    %142 = arith.divf %140, %141 : vector<8x96xf32>
    %143 = vector.extract_strided_slice %136 {offsets = [0, 96], sizes = [8, 32], strides = [1, 1]} : vector<8x128xf32> to vector<8x32xf32>
    %144 = math.tanh %143 : vector<8x32xf32>
    %145 = vector.extract_strided_slice %142 {offsets = [0, 0], sizes = [8, 32], strides = [1, 1]} : vector<8x96xf32> to vector<8x32xf32>
    %146 = vector.extract_strided_slice %142 {offsets = [0, 32], sizes = [8, 32], strides = [1, 1]} : vector<8x96xf32> to vector<8x32xf32>
    %147 = vector.extract_strided_slice %142 {offsets = [0, 64], sizes = [8, 32], strides = [1, 1]} : vector<8x96xf32> to vector<8x32xf32>
    %148 = arith.mulf %146, %126 : vector<8x32xf32>
    %149 = arith.mulf %145, %144 : vector<8x32xf32>
    %150 = arith.addf %148, %149 : vector<8x32xf32>
    %151 = math.tanh %150 : vector<8x32xf32>
    %152 = arith.mulf %147, %151 : vector<8x32xf32>
    %153 = arith.index_cast %132 : i32 to index
    %c0_40 = arith.constant 0 : index
    %154 = vector.load %arg12[%153, %c0_40] : memref<64x32xf32, #tpu.memory_space<vmem>>, vector<8x32xf32>
    tpu.vector_store %arg12[%153, %c0_40], %152 {strides = array<i32>} : memref<64x32xf32, #tpu.memory_space<vmem>>, vector<8x32xf32>,
    %c6_i32 = arith.constant 6 : i32
    %c8_i32_41 = arith.constant 8 : i32
    %155 = arith.muli %c6_i32, %c8_i32_41 : i32
    %156 = tpu.assume_multiple %155, 8 : i32
    %157 = arith.index_cast %156 : i32 to index
    %c0_42 = arith.constant 0 : index
    %158 = vector.load %arg11[%157, %c0_42] : memref<64x128xf32, #tpu.memory_space<vmem>>, vector<8x128xf32>
    %cst_43 = arith.constant dense<0.000000e+00> : vector<8x128xf32>
    %159 = tpu.matmul %152, %1, %cst_43 {dimension_numbers = #tpu.dot_dimension_numbers<[1], [0], [0], [1], [0, 0, 1, 1], [], []>} : vector<8x32xf32>, vector<32x128xf32>, vector<8x128xf32> -> vector<8x128xf32>
    %160 = arith.addf %158, %159 : vector<8x128xf32>
    %161 = vector.extract_strided_slice %160 {offsets = [0, 0], sizes = [8, 96], strides = [1, 1]} : vector<8x128xf32> to vector<8x96xf32>
    %162 = arith.negf %161 : vector<8x96xf32>
    %163 = math.exp %162 : vector<8x96xf32>
    %cst_44 = arith.constant 1.000000e+00 : f32
    %164 = vector.broadcast %cst_44 : f32 to vector<8x96xf32>
    %165 = arith.addf %164, %163 : vector<8x96xf32>
    %166 = arith.divf %164, %165 : vector<8x96xf32>
    %167 = vector.extract_strided_slice %160 {offsets = [0, 96], sizes = [8, 32], strides = [1, 1]} : vector<8x128xf32> to vector<8x32xf32>
    %168 = math.tanh %167 : vector<8x32xf32>
    %169 = vector.extract_strided_slice %166 {offsets = [0, 0], sizes = [8, 32], strides = [1, 1]} : vector<8x96xf32> to vector<8x32xf32>
    %170 = vector.extract_strided_slice %166 {offsets = [0, 32], sizes = [8, 32], strides = [1, 1]} : vector<8x96xf32> to vector<8x32xf32>
    %171 = vector.extract_strided_slice %166 {offsets = [0, 64], sizes = [8, 32], strides = [1, 1]} : vector<8x96xf32> to vector<8x32xf32>
    %172 = arith.mulf %170, %150 : vector<8x32xf32>
    %173 = arith.mulf %169, %168 : vector<8x32xf32>
    %174 = arith.addf %172, %173 : vector<8x32xf32>
    %175 = math.tanh %174 : vector<8x32xf32>
    %176 = arith.mulf %171, %175 : vector<8x32xf32>
    %177 = arith.index_cast %156 : i32 to index
    %c0_45 = arith.constant 0 : index
    %178 = vector.load %arg12[%177, %c0_45] : memref<64x32xf32, #tpu.memory_space<vmem>>, vector<8x32xf32>
    tpu.vector_store %arg12[%177, %c0_45], %176 {strides = array<i32>} : memref<64x32xf32, #tpu.memory_space<vmem>>, vector<8x32xf32>,
    %c7_i32 = arith.constant 7 : i32
    %c8_i32_46 = arith.constant 8 : i32
    %179 = arith.muli %c7_i32, %c8_i32_46 : i32
    %180 = tpu.assume_multiple %179, 8 : i32
    %181 = arith.index_cast %180 : i32 to index
    %c0_47 = arith.constant 0 : index
    %182 = vector.load %arg11[%181, %c0_47] : memref<64x128xf32, #tpu.memory_space<vmem>>, vector<8x128xf32>
    %cst_48 = arith.constant dense<0.000000e+00> : vector<8x128xf32>
    %183 = tpu.matmul %176, %1, %cst_48 {dimension_numbers = #tpu.dot_dimension_numbers<[1], [0], [0], [1], [0, 0, 1, 1], [], []>} : vector<8x32xf32>, vector<32x128xf32>, vector<8x128xf32> -> vector<8x128xf32>
    %184 = arith.addf %182, %183 : vector<8x128xf32>
    %185 = vector.extract_strided_slice %184 {offsets = [0, 0], sizes = [8, 96], strides = [1, 1]} : vector<8x128xf32> to vector<8x96xf32>
    %186 = arith.negf %185 : vector<8x96xf32>
    %187 = math.exp %186 : vector<8x96xf32>
    %cst_49 = arith.constant 1.000000e+00 : f32
    %188 = vector.broadcast %cst_49 : f32 to vector<8x96xf32>
    %189 = arith.addf %188, %187 : vector<8x96xf32>
    %190 = arith.divf %188, %189 : vector<8x96xf32>
    %191 = vector.extract_strided_slice %184 {offsets = [0, 96], sizes = [8, 32], strides = [1, 1]} : vector<8x128xf32> to vector<8x32xf32>
    %192 = math.tanh %191 : vector<8x32xf32>
    %193 = vector.extract_strided_slice %190 {offsets = [0, 0], sizes = [8, 32], strides = [1, 1]} : vector<8x96xf32> to vector<8x32xf32>
    %194 = vector.extract_strided_slice %190 {offsets = [0, 32], sizes = [8, 32], strides = [1, 1]} : vector<8x96xf32> to vector<8x32xf32>
    %195 = vector.extract_strided_slice %190 {offsets = [0, 64], sizes = [8, 32], strides = [1, 1]} : vector<8x96xf32> to vector<8x32xf32>
    %196 = arith.mulf %194, %174 : vector<8x32xf32>
    %197 = arith.mulf %193, %192 : vector<8x32xf32>
    %198 = arith.addf %196, %197 : vector<8x32xf32>
    %199 = math.tanh %198 : vector<8x32xf32>
    %200 = arith.mulf %195, %199 : vector<8x32xf32>
    %201 = arith.index_cast %180 : i32 to index
    %c0_50 = arith.constant 0 : index
    %202 = vector.load %arg12[%201, %c0_50] : memref<64x32xf32, #tpu.memory_space<vmem>>, vector<8x32xf32>
    tpu.vector_store %arg12[%201, %c0_50], %200 {strides = array<i32>} : memref<64x32xf32, #tpu.memory_space<vmem>>, vector<8x32xf32>,
    %c8_i32_51 = arith.constant 8 : i32
    %c0_52 = arith.constant 0 : index
    %c0_53 = arith.constant 0 : index
    %203 = vector.load %arg5[%c0_52, %c0_53] : memref<32x128xf32, #tpu.memory_space<vmem>>, vector<32x128xf32>
    %c0_54 = arith.constant 0 : index
    %c0_55 = arith.constant 0 : index
    %204 = vector.load %arg6[%c0_54, %c0_55] : memref<32x128xf32, #tpu.memory_space<vmem>>, vector<32x128xf32>
    %c0_56 = arith.constant 0 : index
    %c0_57 = arith.constant 0 : index
    %205 = vector.load %arg7[%c0_56, %c0_57] : memref<1x128xf32, #tpu.memory_space<vmem>>, vector<1x128xf32>
    %c0_58 = arith.constant 0 : index
    %c0_59 = arith.constant 0 : index
    %206 = vector.load %arg12[%c0_58, %c0_59] : memref<64x32xf32, #tpu.memory_space<vmem>>, vector<64x32xf32>
    %cst_60 = arith.constant dense<0.000000e+00> : vector<64x128xf32>
    %207 = tpu.matmul %206, %203, %cst_60 {dimension_numbers = #tpu.dot_dimension_numbers<[1], [0], [0], [1], [0, 0, 1, 1], [], []>} : vector<64x32xf32>, vector<32x128xf32>, vector<64x128xf32> -> vector<64x128xf32>
    %208 = vector.broadcast %205 : vector<1x128xf32> to vector<64x128xf32>
    %209 = arith.addf %207, %208 : vector<64x128xf32>
    %c0_61 = arith.constant 0 : index
    %c0_62 = arith.constant 0 : index
    %210 = vector.load %arg11[%c0_61, %c0_62] : memref<64x128xf32, #tpu.memory_space<vmem>>, vector<64x128xf32>
    tpu.vector_store %arg11[%c0_61, %c0_62], %209 {strides = array<i32>} : memref<64x128xf32, #tpu.memory_space<vmem>>, vector<64x128xf32>,
    %cst_63 = arith.constant 0.000000e+00 : f32
    %211 = vector.broadcast %cst_63 : f32 to vector<8x32xf32>
    %cst_64 = arith.constant 0.000000e+00 : f32
    %212 = vector.broadcast %cst_64 : f32 to vector<8x32xf32>
    %c0_i32_65 = arith.constant 0 : i32
    %c8_i32_66 = arith.constant 8 : i32
    %213 = arith.muli %c0_i32_65, %c8_i32_66 : i32
    %214 = tpu.assume_multiple %213, 8 : i32
    %215 = arith.index_cast %214 : i32 to index
    %c0_67 = arith.constant 0 : index
    %216 = vector.load %arg11[%215, %c0_67] : memref<64x128xf32, #tpu.memory_space<vmem>>, vector<8x128xf32>
    %cst_68 = arith.constant dense<0.000000e+00> : vector<8x128xf32>
    %217 = tpu.matmul %211, %204, %cst_68 {dimension_numbers = #tpu.dot_dimension_numbers<[1], [0], [0], [1], [0, 0, 1, 1], [], []>} : vector<8x32xf32>, vector<32x128xf32>, vector<8x128xf32> -> vector<8x128xf32>
    %218 = arith.addf %216, %217 : vector<8x128xf32>
    %219 = vector.extract_strided_slice %218 {offsets = [0, 0], sizes = [8, 96], strides = [1, 1]} : vector<8x128xf32> to vector<8x96xf32>
    %220 = arith.negf %219 : vector<8x96xf32>
    %221 = math.exp %220 : vector<8x96xf32>
    %cst_69 = arith.constant 1.000000e+00 : f32
    %222 = vector.broadcast %cst_69 : f32 to vector<8x96xf32>
    %223 = arith.addf %222, %221 : vector<8x96xf32>
    %224 = arith.divf %222, %223 : vector<8x96xf32>
    %225 = vector.extract_strided_slice %218 {offsets = [0, 96], sizes = [8, 32], strides = [1, 1]} : vector<8x128xf32> to vector<8x32xf32>
    %226 = math.tanh %225 : vector<8x32xf32>
    %227 = vector.extract_strided_slice %224 {offsets = [0, 0], sizes = [8, 32], strides = [1, 1]} : vector<8x96xf32> to vector<8x32xf32>
    %228 = vector.extract_strided_slice %224 {offsets = [0, 32], sizes = [8, 32], strides = [1, 1]} : vector<8x96xf32> to vector<8x32xf32>
    %229 = vector.extract_strided_slice %224 {offsets = [0, 64], sizes = [8, 32], strides = [1, 1]} : vector<8x96xf32> to vector<8x32xf32>
    %230 = arith.mulf %228, %212 : vector<8x32xf32>
    %231 = arith.mulf %227, %226 : vector<8x32xf32>
    %232 = arith.addf %230, %231 : vector<8x32xf32>
    %233 = math.tanh %232 : vector<8x32xf32>
    %234 = arith.mulf %229, %233 : vector<8x32xf32>
    %235 = arith.index_cast %214 : i32 to index
    %c0_70 = arith.constant 0 : index
    %236 = vector.load %arg12[%235, %c0_70] : memref<64x32xf32, #tpu.memory_space<vmem>>, vector<8x32xf32>
    tpu.vector_store %arg12[%235, %c0_70], %234 {strides = array<i32>} : memref<64x32xf32, #tpu.memory_space<vmem>>, vector<8x32xf32>,
    %c1_i32_71 = arith.constant 1 : i32
    %c8_i32_72 = arith.constant 8 : i32
    %237 = arith.muli %c1_i32_71, %c8_i32_72 : i32
    %238 = tpu.assume_multiple %237, 8 : i32
    %239 = arith.index_cast %238 : i32 to index
    %c0_73 = arith.constant 0 : index
    %240 = vector.load %arg11[%239, %c0_73] : memref<64x128xf32, #tpu.memory_space<vmem>>, vector<8x128xf32>
    %cst_74 = arith.constant dense<0.000000e+00> : vector<8x128xf32>
    %241 = tpu.matmul %234, %204, %cst_74 {dimension_numbers = #tpu.dot_dimension_numbers<[1], [0], [0], [1], [0, 0, 1, 1], [], []>} : vector<8x32xf32>, vector<32x128xf32>, vector<8x128xf32> -> vector<8x128xf32>
    %242 = arith.addf %240, %241 : vector<8x128xf32>
    %243 = vector.extract_strided_slice %242 {offsets = [0, 0], sizes = [8, 96], strides = [1, 1]} : vector<8x128xf32> to vector<8x96xf32>
    %244 = arith.negf %243 : vector<8x96xf32>
    %245 = math.exp %244 : vector<8x96xf32>
    %cst_75 = arith.constant 1.000000e+00 : f32
    %246 = vector.broadcast %cst_75 : f32 to vector<8x96xf32>
    %247 = arith.addf %246, %245 : vector<8x96xf32>
    %248 = arith.divf %246, %247 : vector<8x96xf32>
    %249 = vector.extract_strided_slice %242 {offsets = [0, 96], sizes = [8, 32], strides = [1, 1]} : vector<8x128xf32> to vector<8x32xf32>
    %250 = math.tanh %249 : vector<8x32xf32>
    %251 = vector.extract_strided_slice %248 {offsets = [0, 0], sizes = [8, 32], strides = [1, 1]} : vector<8x96xf32> to vector<8x32xf32>
    %252 = vector.extract_strided_slice %248 {offsets = [0, 32], sizes = [8, 32], strides = [1, 1]} : vector<8x96xf32> to vector<8x32xf32>
    %253 = vector.extract_strided_slice %248 {offsets = [0, 64], sizes = [8, 32], strides = [1, 1]} : vector<8x96xf32> to vector<8x32xf32>
    %254 = arith.mulf %252, %232 : vector<8x32xf32>
    %255 = arith.mulf %251, %250 : vector<8x32xf32>
    %256 = arith.addf %254, %255 : vector<8x32xf32>
    %257 = math.tanh %256 : vector<8x32xf32>
    %258 = arith.mulf %253, %257 : vector<8x32xf32>
    %259 = arith.index_cast %238 : i32 to index
    %c0_76 = arith.constant 0 : index
    %260 = vector.load %arg12[%259, %c0_76] : memref<64x32xf32, #tpu.memory_space<vmem>>, vector<8x32xf32>
    tpu.vector_store %arg12[%259, %c0_76], %258 {strides = array<i32>} : memref<64x32xf32, #tpu.memory_space<vmem>>, vector<8x32xf32>,
    %c2_i32_77 = arith.constant 2 : i32
    %c8_i32_78 = arith.constant 8 : i32
    %261 = arith.muli %c2_i32_77, %c8_i32_78 : i32
    %262 = tpu.assume_multiple %261, 8 : i32
    %263 = arith.index_cast %262 : i32 to index
    %c0_79 = arith.constant 0 : index
    %264 = vector.load %arg11[%263, %c0_79] : memref<64x128xf32, #tpu.memory_space<vmem>>, vector<8x128xf32>
    %cst_80 = arith.constant dense<0.000000e+00> : vector<8x128xf32>
    %265 = tpu.matmul %258, %204, %cst_80 {dimension_numbers = #tpu.dot_dimension_numbers<[1], [0], [0], [1], [0, 0, 1, 1], [], []>} : vector<8x32xf32>, vector<32x128xf32>, vector<8x128xf32> -> vector<8x128xf32>
    %266 = arith.addf %264, %265 : vector<8x128xf32>
    %267 = vector.extract_strided_slice %266 {offsets = [0, 0], sizes = [8, 96], strides = [1, 1]} : vector<8x128xf32> to vector<8x96xf32>
    %268 = arith.negf %267 : vector<8x96xf32>
    %269 = math.exp %268 : vector<8x96xf32>
    %cst_81 = arith.constant 1.000000e+00 : f32
    %270 = vector.broadcast %cst_81 : f32 to vector<8x96xf32>
    %271 = arith.addf %270, %269 : vector<8x96xf32>
    %272 = arith.divf %270, %271 : vector<8x96xf32>
    %273 = vector.extract_strided_slice %266 {offsets = [0, 96], sizes = [8, 32], strides = [1, 1]} : vector<8x128xf32> to vector<8x32xf32>
    %274 = math.tanh %273 : vector<8x32xf32>
    %275 = vector.extract_strided_slice %272 {offsets = [0, 0], sizes = [8, 32], strides = [1, 1]} : vector<8x96xf32> to vector<8x32xf32>
    %276 = vector.extract_strided_slice %272 {offsets = [0, 32], sizes = [8, 32], strides = [1, 1]} : vector<8x96xf32> to vector<8x32xf32>
    %277 = vector.extract_strided_slice %272 {offsets = [0, 64], sizes = [8, 32], strides = [1, 1]} : vector<8x96xf32> to vector<8x32xf32>
    %278 = arith.mulf %276, %256 : vector<8x32xf32>
    %279 = arith.mulf %275, %274 : vector<8x32xf32>
    %280 = arith.addf %278, %279 : vector<8x32xf32>
    %281 = math.tanh %280 : vector<8x32xf32>
    %282 = arith.mulf %277, %281 : vector<8x32xf32>
    %283 = arith.index_cast %262 : i32 to index
    %c0_82 = arith.constant 0 : index
    %284 = vector.load %arg12[%283, %c0_82] : memref<64x32xf32, #tpu.memory_space<vmem>>, vector<8x32xf32>
    tpu.vector_store %arg12[%283, %c0_82], %282 {strides = array<i32>} : memref<64x32xf32, #tpu.memory_space<vmem>>, vector<8x32xf32>,
    %c3_i32_83 = arith.constant 3 : i32
    %c8_i32_84 = arith.constant 8 : i32
    %285 = arith.muli %c3_i32_83, %c8_i32_84 : i32
    %286 = tpu.assume_multiple %285, 8 : i32
    %287 = arith.index_cast %286 : i32 to index
    %c0_85 = arith.constant 0 : index
    %288 = vector.load %arg11[%287, %c0_85] : memref<64x128xf32, #tpu.memory_space<vmem>>, vector<8x128xf32>
    %cst_86 = arith.constant dense<0.000000e+00> : vector<8x128xf32>
    %289 = tpu.matmul %282, %204, %cst_86 {dimension_numbers = #tpu.dot_dimension_numbers<[1], [0], [0], [1], [0, 0, 1, 1], [], []>} : vector<8x32xf32>, vector<32x128xf32>, vector<8x128xf32> -> vector<8x128xf32>
    %290 = arith.addf %288, %289 : vector<8x128xf32>
    %291 = vector.extract_strided_slice %290 {offsets = [0, 0], sizes = [8, 96], strides = [1, 1]} : vector<8x128xf32> to vector<8x96xf32>
    %292 = arith.negf %291 : vector<8x96xf32>
    %293 = math.exp %292 : vector<8x96xf32>
    %cst_87 = arith.constant 1.000000e+00 : f32
    %294 = vector.broadcast %cst_87 : f32 to vector<8x96xf32>
    %295 = arith.addf %294, %293 : vector<8x96xf32>
    %296 = arith.divf %294, %295 : vector<8x96xf32>
    %297 = vector.extract_strided_slice %290 {offsets = [0, 96], sizes = [8, 32], strides = [1, 1]} : vector<8x128xf32> to vector<8x32xf32>
    %298 = math.tanh %297 : vector<8x32xf32>
    %299 = vector.extract_strided_slice %296 {offsets = [0, 0], sizes = [8, 32], strides = [1, 1]} : vector<8x96xf32> to vector<8x32xf32>
    %300 = vector.extract_strided_slice %296 {offsets = [0, 32], sizes = [8, 32], strides = [1, 1]} : vector<8x96xf32> to vector<8x32xf32>
    %301 = vector.extract_strided_slice %296 {offsets = [0, 64], sizes = [8, 32], strides = [1, 1]} : vector<8x96xf32> to vector<8x32xf32>
    %302 = arith.mulf %300, %280 : vector<8x32xf32>
    %303 = arith.mulf %299, %298 : vector<8x32xf32>
    %304 = arith.addf %302, %303 : vector<8x32xf32>
    %305 = math.tanh %304 : vector<8x32xf32>
    %306 = arith.mulf %301, %305 : vector<8x32xf32>
    %307 = arith.index_cast %286 : i32 to index
    %c0_88 = arith.constant 0 : index
    %308 = vector.load %arg12[%307, %c0_88] : memref<64x32xf32, #tpu.memory_space<vmem>>, vector<8x32xf32>
    tpu.vector_store %arg12[%307, %c0_88], %306 {strides = array<i32>} : memref<64x32xf32, #tpu.memory_space<vmem>>, vector<8x32xf32>,
    %c4_i32_89 = arith.constant 4 : i32
    %c8_i32_90 = arith.constant 8 : i32
    %309 = arith.muli %c4_i32_89, %c8_i32_90 : i32
    %310 = tpu.assume_multiple %309, 8 : i32
    %311 = arith.index_cast %310 : i32 to index
    %c0_91 = arith.constant 0 : index
    %312 = vector.load %arg11[%311, %c0_91] : memref<64x128xf32, #tpu.memory_space<vmem>>, vector<8x128xf32>
    %cst_92 = arith.constant dense<0.000000e+00> : vector<8x128xf32>
    %313 = tpu.matmul %306, %204, %cst_92 {dimension_numbers = #tpu.dot_dimension_numbers<[1], [0], [0], [1], [0, 0, 1, 1], [], []>} : vector<8x32xf32>, vector<32x128xf32>, vector<8x128xf32> -> vector<8x128xf32>
    %314 = arith.addf %312, %313 : vector<8x128xf32>
    %315 = vector.extract_strided_slice %314 {offsets = [0, 0], sizes = [8, 96], strides = [1, 1]} : vector<8x128xf32> to vector<8x96xf32>
    %316 = arith.negf %315 : vector<8x96xf32>
    %317 = math.exp %316 : vector<8x96xf32>
    %cst_93 = arith.constant 1.000000e+00 : f32
    %318 = vector.broadcast %cst_93 : f32 to vector<8x96xf32>
    %319 = arith.addf %318, %317 : vector<8x96xf32>
    %320 = arith.divf %318, %319 : vector<8x96xf32>
    %321 = vector.extract_strided_slice %314 {offsets = [0, 96], sizes = [8, 32], strides = [1, 1]} : vector<8x128xf32> to vector<8x32xf32>
    %322 = math.tanh %321 : vector<8x32xf32>
    %323 = vector.extract_strided_slice %320 {offsets = [0, 0], sizes = [8, 32], strides = [1, 1]} : vector<8x96xf32> to vector<8x32xf32>
    %324 = vector.extract_strided_slice %320 {offsets = [0, 32], sizes = [8, 32], strides = [1, 1]} : vector<8x96xf32> to vector<8x32xf32>
    %325 = vector.extract_strided_slice %320 {offsets = [0, 64], sizes = [8, 32], strides = [1, 1]} : vector<8x96xf32> to vector<8x32xf32>
    %326 = arith.mulf %324, %304 : vector<8x32xf32>
    %327 = arith.mulf %323, %322 : vector<8x32xf32>
    %328 = arith.addf %326, %327 : vector<8x32xf32>
    %329 = math.tanh %328 : vector<8x32xf32>
    %330 = arith.mulf %325, %329 : vector<8x32xf32>
    %331 = arith.index_cast %310 : i32 to index
    %c0_94 = arith.constant 0 : index
    %332 = vector.load %arg12[%331, %c0_94] : memref<64x32xf32, #tpu.memory_space<vmem>>, vector<8x32xf32>
    tpu.vector_store %arg12[%331, %c0_94], %330 {strides = array<i32>} : memref<64x32xf32, #tpu.memory_space<vmem>>, vector<8x32xf32>,
    %c5_i32_95 = arith.constant 5 : i32
    %c8_i32_96 = arith.constant 8 : i32
    %333 = arith.muli %c5_i32_95, %c8_i32_96 : i32
    %334 = tpu.assume_multiple %333, 8 : i32
    %335 = arith.index_cast %334 : i32 to index
    %c0_97 = arith.constant 0 : index
    %336 = vector.load %arg11[%335, %c0_97] : memref<64x128xf32, #tpu.memory_space<vmem>>, vector<8x128xf32>
    %cst_98 = arith.constant dense<0.000000e+00> : vector<8x128xf32>
    %337 = tpu.matmul %330, %204, %cst_98 {dimension_numbers = #tpu.dot_dimension_numbers<[1], [0], [0], [1], [0, 0, 1, 1], [], []>} : vector<8x32xf32>, vector<32x128xf32>, vector<8x128xf32> -> vector<8x128xf32>
    %338 = arith.addf %336, %337 : vector<8x128xf32>
    %339 = vector.extract_strided_slice %338 {offsets = [0, 0], sizes = [8, 96], strides = [1, 1]} : vector<8x128xf32> to vector<8x96xf32>
    %340 = arith.negf %339 : vector<8x96xf32>
    %341 = math.exp %340 : vector<8x96xf32>
    %cst_99 = arith.constant 1.000000e+00 : f32
    %342 = vector.broadcast %cst_99 : f32 to vector<8x96xf32>
    %343 = arith.addf %342, %341 : vector<8x96xf32>
    %344 = arith.divf %342, %343 : vector<8x96xf32>
    %345 = vector.extract_strided_slice %338 {offsets = [0, 96], sizes = [8, 32], strides = [1, 1]} : vector<8x128xf32> to vector<8x32xf32>
    %346 = math.tanh %345 : vector<8x32xf32>
    %347 = vector.extract_strided_slice %344 {offsets = [0, 0], sizes = [8, 32], strides = [1, 1]} : vector<8x96xf32> to vector<8x32xf32>
    %348 = vector.extract_strided_slice %344 {offsets = [0, 32], sizes = [8, 32], strides = [1, 1]} : vector<8x96xf32> to vector<8x32xf32>
    %349 = vector.extract_strided_slice %344 {offsets = [0, 64], sizes = [8, 32], strides = [1, 1]} : vector<8x96xf32> to vector<8x32xf32>
    %350 = arith.mulf %348, %328 : vector<8x32xf32>
    %351 = arith.mulf %347, %346 : vector<8x32xf32>
    %352 = arith.addf %350, %351 : vector<8x32xf32>
    %353 = math.tanh %352 : vector<8x32xf32>
    %354 = arith.mulf %349, %353 : vector<8x32xf32>
    %355 = arith.index_cast %334 : i32 to index
    %c0_100 = arith.constant 0 : index
    %356 = vector.load %arg12[%355, %c0_100] : memref<64x32xf32, #tpu.memory_space<vmem>>, vector<8x32xf32>
    tpu.vector_store %arg12[%355, %c0_100], %354 {strides = array<i32>} : memref<64x32xf32, #tpu.memory_space<vmem>>, vector<8x32xf32>,
    %c6_i32_101 = arith.constant 6 : i32
    %c8_i32_102 = arith.constant 8 : i32
    %357 = arith.muli %c6_i32_101, %c8_i32_102 : i32
    %358 = tpu.assume_multiple %357, 8 : i32
    %359 = arith.index_cast %358 : i32 to index
    %c0_103 = arith.constant 0 : index
    %360 = vector.load %arg11[%359, %c0_103] : memref<64x128xf32, #tpu.memory_space<vmem>>, vector<8x128xf32>
    %cst_104 = arith.constant dense<0.000000e+00> : vector<8x128xf32>
    %361 = tpu.matmul %354, %204, %cst_104 {dimension_numbers = #tpu.dot_dimension_numbers<[1], [0], [0], [1], [0, 0, 1, 1], [], []>} : vector<8x32xf32>, vector<32x128xf32>, vector<8x128xf32> -> vector<8x128xf32>
    %362 = arith.addf %360, %361 : vector<8x128xf32>
    %363 = vector.extract_strided_slice %362 {offsets = [0, 0], sizes = [8, 96], strides = [1, 1]} : vector<8x128xf32> to vector<8x96xf32>
    %364 = arith.negf %363 : vector<8x96xf32>
    %365 = math.exp %364 : vector<8x96xf32>
    %cst_105 = arith.constant 1.000000e+00 : f32
    %366 = vector.broadcast %cst_105 : f32 to vector<8x96xf32>
    %367 = arith.addf %366, %365 : vector<8x96xf32>
    %368 = arith.divf %366, %367 : vector<8x96xf32>
    %369 = vector.extract_strided_slice %362 {offsets = [0, 96], sizes = [8, 32], strides = [1, 1]} : vector<8x128xf32> to vector<8x32xf32>
    %370 = math.tanh %369 : vector<8x32xf32>
    %371 = vector.extract_strided_slice %368 {offsets = [0, 0], sizes = [8, 32], strides = [1, 1]} : vector<8x96xf32> to vector<8x32xf32>
    %372 = vector.extract_strided_slice %368 {offsets = [0, 32], sizes = [8, 32], strides = [1, 1]} : vector<8x96xf32> to vector<8x32xf32>
    %373 = vector.extract_strided_slice %368 {offsets = [0, 64], sizes = [8, 32], strides = [1, 1]} : vector<8x96xf32> to vector<8x32xf32>
    %374 = arith.mulf %372, %352 : vector<8x32xf32>
    %375 = arith.mulf %371, %370 : vector<8x32xf32>
    %376 = arith.addf %374, %375 : vector<8x32xf32>
    %377 = math.tanh %376 : vector<8x32xf32>
    %378 = arith.mulf %373, %377 : vector<8x32xf32>
    %379 = arith.index_cast %358 : i32 to index
    %c0_106 = arith.constant 0 : index
    %380 = vector.load %arg12[%379, %c0_106] : memref<64x32xf32, #tpu.memory_space<vmem>>, vector<8x32xf32>
    tpu.vector_store %arg12[%379, %c0_106], %378 {strides = array<i32>} : memref<64x32xf32, #tpu.memory_space<vmem>>, vector<8x32xf32>,
    %c7_i32_107 = arith.constant 7 : i32
    %c8_i32_108 = arith.constant 8 : i32
    %381 = arith.muli %c7_i32_107, %c8_i32_108 : i32
    %382 = tpu.assume_multiple %381, 8 : i32
    %383 = arith.index_cast %382 : i32 to index
    %c0_109 = arith.constant 0 : index
    %384 = vector.load %arg11[%383, %c0_109] : memref<64x128xf32, #tpu.memory_space<vmem>>, vector<8x128xf32>
    %cst_110 = arith.constant dense<0.000000e+00> : vector<8x128xf32>
    %385 = tpu.matmul %378, %204, %cst_110 {dimension_numbers = #tpu.dot_dimension_numbers<[1], [0], [0], [1], [0, 0, 1, 1], [], []>} : vector<8x32xf32>, vector<32x128xf32>, vector<8x128xf32> -> vector<8x128xf32>
    %386 = arith.addf %384, %385 : vector<8x128xf32>
    %387 = vector.extract_strided_slice %386 {offsets = [0, 0], sizes = [8, 96], strides = [1, 1]} : vector<8x128xf32> to vector<8x96xf32>
    %388 = arith.negf %387 : vector<8x96xf32>
    %389 = math.exp %388 : vector<8x96xf32>
    %cst_111 = arith.constant 1.000000e+00 : f32
    %390 = vector.broadcast %cst_111 : f32 to vector<8x96xf32>
    %391 = arith.addf %390, %389 : vector<8x96xf32>
    %392 = arith.divf %390, %391 : vector<8x96xf32>
    %393 = vector.extract_strided_slice %386 {offsets = [0, 96], sizes = [8, 32], strides = [1, 1]} : vector<8x128xf32> to vector<8x32xf32>
    %394 = math.tanh %393 : vector<8x32xf32>
    %395 = vector.extract_strided_slice %392 {offsets = [0, 0], sizes = [8, 32], strides = [1, 1]} : vector<8x96xf32> to vector<8x32xf32>
    %396 = vector.extract_strided_slice %392 {offsets = [0, 32], sizes = [8, 32], strides = [1, 1]} : vector<8x96xf32> to vector<8x32xf32>
    %397 = vector.extract_strided_slice %392 {offsets = [0, 64], sizes = [8, 32], strides = [1, 1]} : vector<8x96xf32> to vector<8x32xf32>
    %398 = arith.mulf %396, %376 : vector<8x32xf32>
    %399 = arith.mulf %395, %394 : vector<8x32xf32>
    %400 = arith.addf %398, %399 : vector<8x32xf32>
    %401 = math.tanh %400 : vector<8x32xf32>
    %402 = arith.mulf %397, %401 : vector<8x32xf32>
    %403 = arith.index_cast %382 : i32 to index
    %c0_112 = arith.constant 0 : index
    %404 = vector.load %arg12[%403, %c0_112] : memref<64x32xf32, #tpu.memory_space<vmem>>, vector<8x32xf32>
    tpu.vector_store %arg12[%403, %c0_112], %402 {strides = array<i32>} : memref<64x32xf32, #tpu.memory_space<vmem>>, vector<8x32xf32>,
    %c8_i32_113 = arith.constant 8 : i32
    %c0_114 = arith.constant 0 : index
    %c0_115 = arith.constant 0 : index
    %405 = vector.load %arg8[%c0_114, %c0_115] : memref<32x4xf32, #tpu.memory_space<vmem>>, vector<32x4xf32>
    %cst_116 = arith.constant dense<0.000000e+00> : vector<8x4xf32>
    %406 = tpu.matmul %402, %405, %cst_116 {dimension_numbers = #tpu.dot_dimension_numbers<[1], [0], [0], [1], [0, 0, 1, 1], [], []>} : vector<8x32xf32>, vector<32x4xf32>, vector<8x4xf32> -> vector<8x4xf32>
    %c0_117 = arith.constant 0 : index
    %c0_118 = arith.constant 0 : index
    %407 = vector.load %arg9[%c0_117, %c0_118] : memref<1x4xf32, #tpu.memory_space<vmem>>, vector<1x4xf32>
    %408 = vector.broadcast %407 : vector<1x4xf32> to vector<8x4xf32>
    %409 = arith.addf %406, %408 : vector<8x4xf32>
    %c0_119 = arith.constant 0 : index
    %c0_120 = arith.constant 0 : index
    %c0_121 = arith.constant 0 : index
    %410 = vector.load %arg10[%c0_119, %c0_120, %c0_121] : memref<1x8x4xf32, #tpu.memory_space<vmem>>, vector<1x8x4xf32>
    %411 = vector.shape_cast %410 : vector<1x8x4xf32> to vector<8x4xf32>
    %412 = vector.shape_cast %409 : vector<8x4xf32> to vector<1x8x4xf32>
    tpu.vector_store %arg10[%c0_119, %c0_120, %c0_121], %412 {strides = array<i32>} : memref<1x8x4xf32, #tpu.memory_space<vmem>>, vector<1x8x4xf32>,
    return
  }
  func.func @transform_0(%arg0: i32) -> (i32, i32, i32) {
    %c0_i32 = arith.constant 0 : i32
    %c0_i32_0 = arith.constant 0 : i32
    %c0_i32_1 = arith.constant 0 : i32
    return %arg0, %c0_i32, %c0_i32_0 : i32, i32, i32
  }
  func.func @transform_1(%arg0: i32) -> (i32, i32) {
    %c0_i32 = arith.constant 0 : i32
    %c0_i32_0 = arith.constant 0 : i32
    %c0_i32_1 = arith.constant 0 : i32
    return %c0_i32, %c0_i32_0 : i32, i32
  }
  func.func @transform_2(%arg0: i32) -> (i32, i32) {
    %c0_i32 = arith.constant 0 : i32
    %c0_i32_0 = arith.constant 0 : i32
    %c0_i32_1 = arith.constant 0 : i32
    return %c0_i32, %c0_i32_0 : i32, i32
  }
  func.func @transform_3(%arg0: i32) -> (i32, i32) {
    %c0_i32 = arith.constant 0 : i32
    %c0_i32_0 = arith.constant 0 : i32
    %c0_i32_1 = arith.constant 0 : i32
    return %c0_i32, %c0_i32_0 : i32, i32
  }
  func.func @transform_4(%arg0: i32) -> (i32, i32) {
    %c0_i32 = arith.constant 0 : i32
    %c0_i32_0 = arith.constant 0 : i32
    %c0_i32_1 = arith.constant 0 : i32
    return %c0_i32, %c0_i32_0 : i32, i32
  }
  func.func @transform_5(%arg0: i32) -> (i32, i32) {
    %c0_i32 = arith.constant 0 : i32
    %c0_i32_0 = arith.constant 0 : i32
    %c0_i32_1 = arith.constant 0 : i32
    return %c0_i32, %c0_i32_0 : i32, i32
  }
  func.func @transform_6(%arg0: i32) -> (i32, i32) {
    %c0_i32 = arith.constant 0 : i32
    %c0_i32_0 = arith.constant 0 : i32
    %c0_i32_1 = arith.constant 0 : i32
    return %c0_i32, %c0_i32_0 : i32, i32
  }
  func.func @transform_7(%arg0: i32) -> (i32, i32) {
    %c0_i32 = arith.constant 0 : i32
    %c0_i32_0 = arith.constant 0 : i32
    %c0_i32_1 = arith.constant 0 : i32
    return %c0_i32, %c0_i32_0 : i32, i32
  }
  func.func @transform_8(%arg0: i32) -> (i32, i32) {
    %c0_i32 = arith.constant 0 : i32
    %c0_i32_0 = arith.constant 0 : i32
    %c0_i32_1 = arith.constant 0 : i32
    return %c0_i32, %c0_i32_0 : i32, i32
  }
  func.func @transform_9(%arg0: i32) -> (i32, i32, i32) {
    %c0_i32 = arith.constant 0 : i32
    %c0_i32_0 = arith.constant 0 : i32
    %c0_i32_1 = arith.constant 0 : i32
    return %arg0, %c0_i32, %c0_i32_0 : i32, i32, i32
  }
}

</mosaic_0001>

<llo_original>
// kernel: tpu_custom_call.1
$region0: #{tpu_custom_call.1}
  #allocation0 [shape = 'u32[]', space=smem, size = 0x4, offset = 0x4, fixed_abs, tag = 'smem constant byte address 0x4 - core index']
  #allocation1 [shape = 'u32[144,128]{1,0:T(1,128)}', space=vmem, size = 0x12000, scoped, tag = 'internal scratch']
  #allocation2 [shape = 'f32[64,128]{1,0:T(8,128)}', space=vmem, size = 0x8000, scoped, tag = 'scratch operand']
  #allocation3 [shape = 'f32[64,32]{1,0:T(8,128)}', space=vmem, size = 0x8000, scoped, tag = 'scratch operand']
  %s0 = inlined_call_operand.vmem [shape: f32[1,64,8], index: 0, kind: input, shape index: {}]
  %s1 = inlined_call_operand.vmem [shape: f32[8,128], index: 1, kind: input, shape index: {}]
  %s2 = inlined_call_operand.vmem [shape: f32[32,128], index: 2, kind: input, shape index: {}]
  %s3 = inlined_call_operand.vmem [shape: f32[1,128], index: 3, kind: input, shape index: {}]
  %s4 = inlined_call_operand.vmem [shape: f32[32,128], index: 4, kind: input, shape index: {}]
  %s5 = inlined_call_operand.vmem [shape: f32[32,128], index: 5, kind: input, shape index: {}]
  %s6 = inlined_call_operand.vmem [shape: f32[1,128], index: 6, kind: input, shape index: {}]
  %s7 = inlined_call_operand.vmem [shape: f32[32,4], index: 7, kind: input, shape index: {}]
  %s8 = inlined_call_operand.vmem [shape: f32[1,4], index: 8, kind: input, shape index: {}]
  %s9 = inlined_call_operand.vmem [shape: f32[1,8,4], index: 9, kind: output, shape index: {}]
  %s10 = sld [smem:[#allocation0]]
  $region46: #{tpu_custom_call.1} parent=0
    _
  %s12 = ssub.s32 1, %s10
  %s13 = scalar_select 0, %s12, %s10
  // Predicated region
  $region2: #{tpu_custom_call.1} parent=0 // pred_check
    _
  $region3: #{tpu_custom_call.1} parent=0 // pred_check_branch
    %15 = sbr.rel (0) target = $region5
  $region4: #{tpu_custom_call.1} parent=0 // pred_region
    _
  $region5: #{tpu_custom_call.1} parent=0 // pred_fallthru
    _
  // Predicated region
  $region6: #{tpu_custom_call.1} parent=0 // pred_check
    _
  $region7: #{tpu_custom_call.1} parent=0 // pred_check_branch
    %17 = sbr.rel (0) target = $region9
  $region8: #{tpu_custom_call.1} parent=0 // pred_region
    _
  $region9: #{tpu_custom_call.1} parent=0 // pred_fallthru
    _
  // Predicated region
  $region10: #{tpu_custom_call.1} parent=0 // pred_check
    _
  $region11: #{tpu_custom_call.1} parent=0 // pred_check_branch
    %19 = sbr.rel (0) target = $region13
  $region12: #{tpu_custom_call.1} parent=0 // pred_region
    _
  $region13: #{tpu_custom_call.1} parent=0 // pred_fallthru
    _
  // Predicated region
  $region14: #{tpu_custom_call.1} parent=0 // pred_check
    _
  $region15: #{tpu_custom_call.1} parent=0 // pred_check_branch
    %21 = sbr.rel (0) target = $region17
  $region16: #{tpu_custom_call.1} parent=0 // pred_region
    _
  $region17: #{tpu_custom_call.1} parent=0 // pred_fallthru
    _
  // Predicated region
  $region18: #{tpu_custom_call.1} parent=0 // pred_check
    _
  $region19: #{tpu_custom_call.1} parent=0 // pred_check_branch
    %23 = sbr.rel (0) target = $region21
  $region20: #{tpu_custom_call.1} parent=0 // pred_region
    _
  $region21: #{tpu_custom_call.1} parent=0 // pred_fallthru
    _
  // Predicated region
  $region22: #{tpu_custom_call.1} parent=0 // pred_check
    _
  $region23: #{tpu_custom_call.1} parent=0 // pred_check_branch
    %25 = sbr.rel (0) target = $region25
  $region24: #{tpu_custom_call.1} parent=0 // pred_region
    _
  $region25: #{tpu_custom_call.1} parent=0 // pred_fallthru
    _
  // Predicated region
  $region26: #{tpu_custom_call.1} parent=0 // pred_check
    _
  $region27: #{tpu_custom_call.1} parent=0 // pred_check_branch
    %27 = sbr.rel (0) target = $region29
  $region28: #{tpu_custom_call.1} parent=0 // pred_region
    _
  $region29: #{tpu_custom_call.1} parent=0 // pred_fallthru
    _
  // Predicated region
  $region30: #{tpu_custom_call.1} parent=0 // pred_check
    _
  $region31: #{tpu_custom_call.1} parent=0 // pred_check_branch
    %29 = sbr.rel (0) target = $region33
  $region32: #{tpu_custom_call.1} parent=0 // pred_region
    _
  $region33: #{tpu_custom_call.1} parent=0 // pred_fallthru
    _
  // Predicated region
  $region34: #{tpu_custom_call.1} parent=0 // pred_check
    _
  $region35: #{tpu_custom_call.1} parent=0 // pred_check_branch
    %31 = sbr.rel (0) target = $region37
  $region36: #{tpu_custom_call.1} parent=0 // pred_region
    _
  $region37: #{tpu_custom_call.1} parent=0 // pred_fallthru
    _
  %v32 = vld [vmem:[%s1] sm:$0xff]
  %v33 = vld [vmem:[%s2] sm:$0xff]
  %v34 = vld [vmem:[%s2 + $0x8] sm:$0xff]
  %v35 = vld [vmem:[%s2 + $0x10] sm:$0xff]
  %v36 = vld [vmem:[%s2 + $0x18] sm:$0xff]
  %v37 = vld [vmem:[%s3] sm:$0x1]
  %v38 = vld [vmem:[%s0] sm:$0xff]
  %v39 = vld [vmem:[%s0 + $0x8] sm:$0xff]
  %v40 = vld [vmem:[%s0 + $0x10] sm:$0xff]
  %v41 = vld [vmem:[%s0 + $0x18] sm:$0xff]
  %v42 = vld [vmem:[%s0 + $0x20] sm:$0xff]
  %v43 = vld [vmem:[%s0 + $0x28] sm:$0xff]
  %v44 = vld [vmem:[%s0 + $0x30] sm:$0xff]
  %v45 = vld [vmem:[%s0 + $0x38] sm:$0xff]
  %v47 = vlaneseq
  %v48 = vshrl.u32 %v47, 7
  %v49 = vsub.s32 0, %v48
  %v50 = vrot.slane %v37, %v49
  %vm52 = vcmask 64512
  %v54 = vsel %vm52, %v38, 0
  %v57 = vsel %vm52, %v39, 0
  %v60 = vsel %vm52, %v40, 0
  %v63 = vsel %vm52, %v41, 0
  %v66 = vsel %vm52, %v42, 0
  %v69 = vsel %vm52, %v43, 0
  %v72 = vsel %vm52, %v44, 0
  %v75 = vsel %vm52, %v45, 0
  %77 = vmatprep.subr.mxu0 0.0
  %78 = vmatpush1.msra.mxu0 0.0
  %79 = vmatprep.subr.mxu0 0.0
  %80 = vmatpush1.msra.mxu0 0.0
  %81 = vmatprep.subr.mxu0 0.0
  %82 = vmatpush1.msra.mxu0 0.0
  %83 = vmatprep.subr.mxu0 0.0
  %84 = vmatpush1.msra.mxu0 0.0
  %85 = vmatprep.subr.mxu0 0.0
  %86 = vmatpush1.msra.mxu0 0.0
  %87 = vmatprep.subr.mxu0 0.0
  %88 = vmatpush1.msra.mxu0 0.0
  %89 = vmatprep.subr.mxu0 0.0
  %90 = vmatpush1.msra.mxu0 0.0
  %91 = vmatprep.subr.mxu0 0.0
  %92 = vmatpush1.msra.mxu0 0.0
  %93 = vmatprep.subr.mxu0 0.0
  %94 = vmatpush1.msra.mxu0 0.0
  %95 = vmatprep.subr.mxu0 0.0
  %96 = vmatpush1.msra.mxu0 0.0
  %97 = vmatprep.subr.mxu0 0.0
  %98 = vmatpush1.msra.mxu0 0.0
  %99 = vmatprep.subr.mxu0 0.0
  %100 = vmatpush1.msra.mxu0 0.0
  %101 = vmatprep.subr.mxu0 0.0
  %102 = vmatpush1.msra.mxu0 0.0
  %103 = vmatprep.subr.mxu0 0.0
  %104 = vmatpush1.msra.mxu0 0.0
  %105 = vmatprep.subr.mxu0 0.0
  %106 = vmatpush1.msra.mxu0 0.0
  %107 = vmatprep.subr.mxu0 0.0
  %108 = vmatpush1.msra.mxu0 %v32
  %109 = vmatprep.subr.mxu0 0.0
  %110 = vmatpush2.msra.mxu0 0.0
  %111 = vmatprep.subr.mxu0 0.0
  %112 = vmatpush2.msra.mxu0 0.0
  %113 = vmatprep.subr.mxu0 0.0
  %114 = vmatpush2.msra.mxu0 0.0
  %115 = vmatprep.subr.mxu0 0.0
  %116 = vmatpush2.msra.mxu0 0.0
  %117 = vmatprep.subr.mxu0 0.0
  %118 = vmatpush2.msra.mxu0 0.0
  %119 = vmatprep.subr.mxu0 0.0
  %120 = vmatpush2.msra.mxu0 0.0
  %121 = vmatprep.subr.mxu0 0.0
  %122 = vmatpush2.msra.mxu0 0.0
  %123 = vmatprep.subr.mxu0 0.0
  %124 = vmatpush2.msra.mxu0 0.0
  %125 = vmatprep.subr.mxu0 0.0
  %126 = vmatpush2.msra.mxu0 0.0
  %127 = vmatprep.subr.mxu0 0.0
  %128 = vmatpush2.msra.mxu0 0.0
  %129 = vmatprep.subr.mxu0 0.0
  %130 = vmatpush2.msra.mxu0 0.0
  %131 = vmatprep.subr.mxu0 0.0
  %132 = vmatpush2.msra.mxu0 0.0
  %133 = vmatprep.subr.mxu0 0.0
  %134 = vmatpush2.msra.mxu0 0.0
  %135 = vmatprep.subr.mxu0 0.0
  %136 = vmatpush2.msra.mxu0 0.0
  %137 = vmatprep.subr.mxu0 0.0
  %138 = vmatpush2.msra.mxu0 0.0
  %139 = vmatprep.subr.mxu0 0.0
  %140 = vmatpush2.msra.mxu0 0.0
  %141 = vmatprep.mubr.f32.mxu0 0.0
  %142 = vmatmul.mubr.f32.gmra.mxu0 %v54
  %v143 = vpop.f32.mrf.mxu0
  %v144 = vadd.f32 %v50, %v143
  %v145 = vpop.f32.mrf.mxu0
  %146 = vmatprep.mubr.f32.mxu0 0.0
  %147 = vmatmul.mubr.f32.gmra.mxu0 %v57
  %v148 = vpop.f32.mrf.mxu0
  %v149 = vadd.f32 %v50, %v148
  %v150 = vpop.f32.mrf.mxu0
  %151 = vmatprep.mubr.f32.mxu0 0.0
  %152 = vmatmul.mubr.f32.gmra.mxu0 %v60
  %v153 = vpop.f32.mrf.mxu0
  %v154 = vadd.f32 %v50, %v153
  %v155 = vpop.f32.mrf.mxu0
  %156 = vmatprep.mubr.f32.mxu0 0.0
  %157 = vmatmul.mubr.f32.gmra.mxu0 %v63
  %v158 = vpop.f32.mrf.mxu0
  %v159 = vadd.f32 %v50, %v158
  %v160 = vpop.f32.mrf.mxu0
  %161 = vmatprep.mubr.f32.mxu0 0.0
  %162 = vmatmul.mubr.f32.gmra.mxu0 %v66
  %v163 = vpop.f32.mrf.mxu0
  %v164 = vadd.f32 %v50, %v163
  %v165 = vpop.f32.mrf.mxu0
  %166 = vmatprep.mubr.f32.mxu0 0.0
  %167 = vmatmul.mubr.f32.gmra.mxu0 %v69
  %v168 = vpop.f32.mrf.mxu0
  %v169 = vadd.f32 %v50, %v168
  %v170 = vpop.f32.mrf.mxu0
  %171 = vmatprep.mubr.f32.mxu0 0.0
  %172 = vmatmul.mubr.f32.gmra.mxu0 %v72
  %v173 = vpop.f32.mrf.mxu0
  %v174 = vadd.f32 %v50, %v173
  %v175 = vpop.f32.mrf.mxu0
  %176 = vmatprep.mubr.f32.mxu0 0.0
  %177 = vmatmul.mubr.f32.gmra.mxu0 %v75
  %v178 = vpop.f32.mrf.mxu0
  %v179 = vadd.f32 %v50, %v178
  %v180 = vpop.f32.mrf.mxu0
  %181 = vdwg.mxu0
  %182 = vst [vmem:[#allocation2] sm:$0xff] %v144
  %183 = vst [vmem:[#allocation2 + $0x8] sm:$0xff] %v149
  %184 = vst [vmem:[#allocation2 + $0x10] sm:$0xff] %v154
  %185 = vst [vmem:[#allocation2 + $0x18] sm:$0xff] %v159
  %186 = vst [vmem:[#allocation2 + $0x20] sm:$0xff] %v164
  %187 = vst [vmem:[#allocation2 + $0x28] sm:$0xff] %v169
  %188 = vst [vmem:[#allocation2 + $0x30] sm:$0xff] %v174
  %189 = vst [vmem:[#allocation2 + $0x38] sm:$0xff] %v179
  %v190 = vld [vmem:[#allocation2] sm:$0xff]
  %vm191 = vcmask 261120
  %v193 = vsel %vm191, 0.0, 0
  %195 = vmatprep.subr.mxu0 0.0
  %196 = vmatpush1.msra.mxu0 0.0
  %197 = vmatprep.subr.mxu0 0.0
  %198 = vmatpush1.msra.mxu0 0.0
  %199 = vmatprep.subr.mxu0 0.0
  %200 = vmatpush1.msra.mxu0 0.0
  %201 = vmatprep.subr.mxu0 0.0
  %202 = vmatpush1.msra.mxu0 0.0
  %203 = vmatprep.subr.mxu0 0.0
  %204 = vmatpush1.msra.mxu0 0.0
  %205 = vmatprep.subr.mxu0 0.0
  %206 = vmatpush1.msra.mxu0 0.0
  %207 = vmatprep.subr.mxu0 0.0
  %208 = vmatpush1.msra.mxu0 0.0
  %209 = vmatprep.subr.mxu0 0.0
  %210 = vmatpush1.msra.mxu0 0.0
  %211 = vmatprep.subr.mxu0 0.0
  %212 = vmatpush1.msra.mxu0 0.0
  %213 = vmatprep.subr.mxu0 0.0
  %214 = vmatpush1.msra.mxu0 0.0
  %215 = vmatprep.subr.mxu0 0.0
  %216 = vmatpush1.msra.mxu0 0.0
  %217 = vmatprep.subr.mxu0 0.0
  %218 = vmatpush1.msra.mxu0 0.0
  %219 = vmatprep.subr.mxu0 0.0
  %220 = vmatpush1.msra.mxu0 %v36
  %221 = vmatprep.subr.mxu0 0.0
  %222 = vmatpush1.msra.mxu0 %v35
  %223 = vmatprep.subr.mxu0 0.0
  %224 = vmatpush1.msra.mxu0 %v34
  %225 = vmatprep.subr.mxu0 0.0
  %226 = vmatpush1.msra.mxu0 %v33
  %227 = vmatprep.subr.mxu0 0.0
  %228 = vmatpush2.msra.mxu0 0.0
  %229 = vmatprep.subr.mxu0 0.0
  %230 = vmatpush2.msra.mxu0 0.0
  %231 = vmatprep.subr.mxu0 0.0
  %232 = vmatpush2.msra.mxu0 0.0
  %233 = vmatprep.subr.mxu0 0.0
  %234 = vmatpush2.msra.mxu0 0.0
  %235 = vmatprep.subr.mxu0 0.0
  %236 = vmatpush2.msra.mxu0 0.0
  %237 = vmatprep.subr.mxu0 0.0
  %238 = vmatpush2.msra.mxu0 0.0
  %239 = vmatprep.subr.mxu0 0.0
  %240 = vmatpush2.msra.mxu0 0.0
  %241 = vmatprep.subr.mxu0 0.0
  %242 = vmatpush2.msra.mxu0 0.0
  %243 = vmatprep.subr.mxu0 0.0
  %244 = vmatpush2.msra.mxu0 0.0
  %245 = vmatprep.subr.mxu0 0.0
  %246 = vmatpush2.msra.mxu0 0.0
  %247 = vmatprep.subr.mxu0 0.0
  %248 = vmatpush2.msra.mxu0 0.0
  %249 = vmatprep.subr.mxu0 0.0
  %250 = vmatpush2.msra.mxu0 0.0
  %251 = vmatprep.subr.mxu0 0.0
  %252 = vmatpush2.msra.mxu0 0.0
  %253 = vmatprep.subr.mxu0 0.0
  %254 = vmatpush2.msra.mxu0 0.0
  %255 = vmatprep.subr.mxu0 0.0
  %256 = vmatpush2.msra.mxu0 0.0
  %257 = vmatprep.subr.mxu0 0.0
  %258 = vmatpush2.msra.mxu0 0.0
  %259 = vmatprep.mubr.f32.mxu0 0.0
  %260 = vmatmul.mubr.f32.gmra.mxu0 %v193
  %v261 = vpop.f32.mrf.mxu0
  %v262 = vadd.f32 0.0, %v261
  %v263 = vpop.f32.mrf.mxu0
  %264 = vdwg.mxu0
  %v265 = vadd.f32 %v190, %v262
  %v266 = vxor.u32 %v265, 2147483648
  %v267 = vmul.f32 %v266, 1.442695
  %v268 = vpow.pop %v267
  %v269 = vadd.f32 %v268, 1.0
  %v270 = vrcp.pop %v269
  %v271 = vmul.f32 1.0, %v270
  %v272 = vtanh.pop %v265
  %v273 = vmul.f32 %v271, 0.0
  %275 = vrot.lane.b32.xlu0 %v272, 32
  %v276 = vpop.permute.xlu0 %275
  %v278 = vmul.f32 %v271, %v276
  %280 = vrot.lane.b32.xlu0 %v278, 32
  %v281 = vpop.permute.xlu0 %280
  %v283 = vadd.f32 %v273, %v281
  %v284 = vtanh.pop %v283
  %286 = vrot.lane.b32.xlu0 %v284, 32
  %v287 = vpop.permute.xlu0 %286
  %v289 = vmul.f32 %v271, %v287
  %291 = vrot.lane.b32.xlu0 %v289, 64
  %v292 = vpop.permute.xlu0 %291
  %294 = vst.msk [vmem:[#allocation3] sm:$0xff] %vm191, %v292
  %s295 = scalar_lea.vmem [#allocation2], 8
  %v296 = vld [vmem:[%s295] sm:$0xff]
  %v297 = vsel %vm191, %v292, 0
  %299 = vmatprep.subr.mxu0 0.0
  %300 = vmatpush1.msra.mxu0 0.0
  %301 = vmatprep.subr.mxu0 0.0
  %302 = vmatpush1.msra.mxu0 0.0
  %303 = vmatprep.subr.mxu0 0.0
  %304 = vmatpush1.msra.mxu0 0.0
  %305 = vmatprep.subr.mxu0 0.0
  %306 = vmatpush1.msra.mxu0 0.0
  %307 = vmatprep.subr.mxu0 0.0
  %308 = vmatpush1.msra.mxu0 0.0
  %309 = vmatprep.subr.mxu0 0.0
  %310 = vmatpush1.msra.mxu0 0.0
  %311 = vmatprep.subr.mxu0 0.0
  %312 = vmatpush1.msra.mxu0 0.0
  %313 = vmatprep.subr.mxu0 0.0
  %314 = vmatpush1.msra.mxu0 0.0
  %315 = vmatprep.subr.mxu0 0.0
  %316 = vmatpush1.msra.mxu0 0.0
  %317 = vmatprep.subr.mxu0 0.0
  %318 = vmatpush1.msra.mxu0 0.0
  %319 = vmatprep.subr.mxu0 0.0
  %320 = vmatpush1.msra.mxu0 0.0
  %321 = vmatprep.subr.mxu0 0.0
  %322 = vmatpush1.msra.mxu0 0.0
  %323 = vmatprep.subr.mxu0 0.0
  %324 = vmatpush1.msra.mxu0 %v36
  %325 = vmatprep.subr.mxu0 0.0
  %326 = vmatpush1.msra.mxu0 %v35
  %327 = vmatprep.subr.mxu0 0.0
  %328 = vmatpush1.msra.mxu0 %v34
  %329 = vmatprep.subr.mxu0 0.0
  %330 = vmatpush1.msra.mxu0 %v33
  %331 = vmatprep.subr.mxu0 0.0
  %332 = vmatpush2.msra.mxu0 0.0
  %333 = vmatprep.subr.mxu0 0.0
  %334 = vmatpush2.msra.mxu0 0.0
  %335 = vmatprep.subr.mxu0 0.0
  %336 = vmatpush2.msra.mxu0 0.0
  %337 = vmatprep.subr.mxu0 0.0
  %338 = vmatpush2.msra.mxu0 0.0
  %339 = vmatprep.subr.mxu0 0.0
  %340 = vmatpush2.msra.mxu0 0.0
  %341 = vmatprep.subr.mxu0 0.0
  %342 = vmatpush2.msra.mxu0 0.0
  %343 = vmatprep.subr.mxu0 0.0
  %344 = vmatpush2.msra.mxu0 0.0
  %345 = vmatprep.subr.mxu0 0.0
  %346 = vmatpush2.msra.mxu0 0.0
  %347 = vmatprep.subr.mxu0 0.0
  %348 = vmatpush2.msra.mxu0 0.0
  %349 = vmatprep.subr.mxu0 0.0
  %350 = vmatpush2.msra.mxu0 0.0
  %351 = vmatprep.subr.mxu0 0.0
  %352 = vmatpush2.msra.mxu0 0.0
  %353 = vmatprep.subr.mxu0 0.0
  %354 = vmatpush2.msra.mxu0 0.0
  %355 = vmatprep.subr.mxu0 0.0
  %356 = vmatpush2.msra.mxu0 0.0
  %357 = vmatprep.subr.mxu0 0.0
  %358 = vmatpush2.msra.mxu0 0.0
  %359 = vmatprep.subr.mxu0 0.0
  %360 = vmatpush2.msra.mxu0 0.0
  %361 = vmatprep.subr.mxu0 0.0
  %362 = vmatpush2.msra.mxu0 0.0
  %363 = vmatprep.mubr.f32.mxu0 0.0
  %364 = vmatmul.mubr.f32.gmra.mxu0 %v297
  %v365 = vpop.f32.mrf.mxu0
  %v366 = vadd.f32 0.0, %v365
  %v367 = vpop.f32.mrf.mxu0
  %368 = vdwg.mxu0
  %v369 = vadd.f32 %v296, %v366
  %v370 = vxor.u32 %v369, 2147483648
  %v371 = vmul.f32 %v370, 1.442695
  %v372 = vpow.pop %v371
  %v373 = vadd.f32 %v372, 1.0
  %v374 = vrcp.pop %v373
  %v375 = vmul.f32 1.0, %v374
  %v376 = vtanh.pop %v369
  %v377 = vmul.f32 %v375, %v283
  %379 = vrot.lane.b32.xlu0 %v376, 32
  %v380 = vpop.permute.xlu0 %379
  %v382 = vmul.f32 %v375, %v380
  %384 = vrot.lane.b32.xlu0 %v382, 32
  %v385 = vpop.permute.xlu0 %384
  %v387 = vadd.f32 %v377, %v385
  %v388 = vtanh.pop %v387
  %390 = vrot.lane.b32.xlu0 %v388, 32
  %v391 = vpop.permute.xlu0 %390
  %v393 = vmul.f32 %v375, %v391
  %395 = vrot.lane.b32.xlu0 %v393, 64
  %v396 = vpop.permute.xlu0 %395
  %s398 = scalar_lea.vmem [#allocation3], 8
  %399 = vst.msk [vmem:[%s398] sm:$0xff] %vm191, %v396
  %s400 = scalar_lea.vmem [#allocation2], 16
  %v401 = vld [vmem:[%s400] sm:$0xff]
  %v402 = vsel %vm191, %v396, 0
  %404 = vmatprep.subr.mxu0 0.0
  %405 = vmatpush1.msra.mxu0 0.0
  %406 = vmatprep.subr.mxu0 0.0
  %407 = vmatpush1.msra.mxu0 0.0
  %408 = vmatprep.subr.mxu0 0.0
  %409 = vmatpush1.msra.mxu0 0.0
  %410 = vmatprep.subr.mxu0 0.0
  %411 = vmatpush1.msra.mxu0 0.0
  %412 = vmatprep.subr.mxu0 0.0
  %413 = vmatpush1.msra.mxu0 0.0
  %414 = vmatprep.subr.mxu0 0.0
  %415 = vmatpush1.msra.mxu0 0.0
  %416 = vmatprep.subr.mxu0 0.0
  %417 = vmatpush1.msra.mxu0 0.0
  %418 = vmatprep.subr.mxu0 0.0
  %419 = vmatpush1.msra.mxu0 0.0
  %420 = vmatprep.subr.mxu0 0.0
  %421 = vmatpush1.msra.mxu0 0.0
  %422 = vmatprep.subr.mxu0 0.0
  %423 = vmatpush1.msra.mxu0 0.0
  %424 = vmatprep.subr.mxu0 0.0
  %425 = vmatpush1.msra.mxu0 0.0
  %426 = vmatprep.subr.mxu0 0.0
  %427 = vmatpush1.msra.mxu0 0.0
  %428 = vmatprep.subr.mxu0 0.0
  %429 = vmatpush1.msra.mxu0 %v36
  %430 = vmatprep.subr.mxu0 0.0
  %431 = vmatpush1.msra.mxu0 %v35
  %432 = vmatprep.subr.mxu0 0.0
  %433 = vmatpush1.msra.mxu0 %v34
  %434 = vmatprep.subr.mxu0 0.0
  %435 = vmatpush1.msra.mxu0 %v33
  %436 = vmatprep.subr.mxu0 0.0
  %437 = vmatpush2.msra.mxu0 0.0
  %438 = vmatprep.subr.mxu0 0.0
  %439 = vmatpush2.msra.mxu0 0.0
  %440 = vmatprep.subr.mxu0 0.0
  %441 = vmatpush2.msra.mxu0 0.0
  %442 = vmatprep.subr.mxu0 0.0
  %443 = vmatpush2.msra.mxu0 0.0
  %444 = vmatprep.subr.mxu0 0.0
  %445 = vmatpush2.msra.mxu0 0.0
  %446 = vmatprep.subr.mxu0 0.0
  %447 = vmatpush2.msra.mxu0 0.0
  %448 = vmatprep.subr.mxu0 0.0
  %449 = vmatpush2.msra.mxu0 0.0
  %450 = vmatprep.subr.mxu0 0.0
  %451 = vmatpush2.msra.mxu0 0.0
  %452 = vmatprep.subr.mxu0 0.0
  %453 = vmatpush2.msra.mxu0 0.0
  %454 = vmatprep.subr.mxu0 0.0
  %455 = vmatpush2.msra.mxu0 0.0
  %456 = vmatprep.subr.mxu0 0.0
  %457 = vmatpush2.msra.mxu0 0.0
  %458 = vmatprep.subr.mxu0 0.0
  %459 = vmatpush2.msra.mxu0 0.0
  %460 = vmatprep.subr.mxu0 0.0
  %461 = vmatpush2.msra.mxu0 0.0
  %462 = vmatprep.subr.mxu0 0.0
  %463 = vmatpush2.msra.mxu0 0.0
  %464 = vmatprep.subr.mxu0 0.0
  %465 = vmatpush2.msra.mxu0 0.0
  %466 = vmatprep.subr.mxu0 0.0
  %467 = vmatpush2.msra.mxu0 0.0
  %468 = vmatprep.mubr.f32.mxu0 0.0
  %469 = vmatmul.mubr.f32.gmra.mxu0 %v402
  %v470 = vpop.f32.mrf.mxu0
  %v471 = vadd.f32 0.0, %v470
  %v472 = vpop.f32.mrf.mxu0
  %473 = vdwg.mxu0
  %v474 = vadd.f32 %v401, %v471
  %v475 = vxor.u32 %v474, 2147483648
  %v476 = vmul.f32 %v475, 1.442695
  %v477 = vpow.pop %v476
  %v478 = vadd.f32 %v477, 1.0
  %v479 = vrcp.pop %v478
  %v480 = vmul.f32 1.0, %v479
  %v481 = vtanh.pop %v474
  %v482 = vmul.f32 %v480, %v387
  %484 = vrot.lane.b32.xlu0 %v481, 32
  %v485 = vpop.permute.xlu0 %484
  %v487 = vmul.f32 %v480, %v485
  %489 = vrot.lane.b32.xlu0 %v487, 32
  %v490 = vpop.permute.xlu0 %489
  %v492 = vadd.f32 %v482, %v490
  %v493 = vtanh.pop %v492
  %495 = vrot.lane.b32.xlu0 %v493, 32
  %v496 = vpop.permute.xlu0 %495
  %v498 = vmul.f32 %v480, %v496
  %500 = vrot.lane.b32.xlu0 %v498, 64
  %v501 = vpop.permute.xlu0 %500
  %s503 = scalar_lea.vmem [#allocation3], 16
  %504 = vst.msk [vmem:[%s503] sm:$0xff] %vm191, %v501
  %s505 = scalar_lea.vmem [#allocation2], 24
  %v506 = vld [vmem:[%s505] sm:$0xff]
  %v507 = vsel %vm191, %v501, 0
  %509 = vmatprep.subr.mxu0 0.0
  %510 = vmatpush1.msra.mxu0 0.0
  %511 = vmatprep.subr.mxu0 0.0
  %512 = vmatpush1.msra.mxu0 0.0
  %513 = vmatprep.subr.mxu0 0.0
  %514 = vmatpush1.msra.mxu0 0.0
  %515 = vmatprep.subr.mxu0 0.0
  %516 = vmatpush1.msra.mxu0 0.0
  %517 = vmatprep.subr.mxu0 0.0
  %518 = vmatpush1.msra.mxu0 0.0
  %519 = vmatprep.subr.mxu0 0.0
  %520 = vmatpush1.msra.mxu0 0.0
  %521 = vmatprep.subr.mxu0 0.0
  %522 = vmatpush1.msra.mxu0 0.0
  %523 = vmatprep.subr.mxu0 0.0
  %524 = vmatpush1.msra.mxu0 0.0
  %525 = vmatprep.subr.mxu0 0.0
  %526 = vmatpush1.msra.mxu0 0.0
  %527 = vmatprep.subr.mxu0 0.0
  %528 = vmatpush1.msra.mxu0 0.0
  %529 = vmatprep.subr.mxu0 0.0
  %530 = vmatpush1.msra.mxu0 0.0
  %531 = vmatprep.subr.mxu0 0.0
  %532 = vmatpush1.msra.mxu0 0.0
  %533 = vmatprep.subr.mxu0 0.0
  %534 = vmatpush1.msra.mxu0 %v36
  %535 = vmatprep.subr.mxu0 0.0
  %536 = vmatpush1.msra.mxu0 %v35
  %537 = vmatprep.subr.mxu0 0.0
  %538 = vmatpush1.msra.mxu0 %v34
  %539 = vmatprep.subr.mxu0 0.0
  %540 = vmatpush1.msra.mxu0 %v33
  %541 = vmatprep.subr.mxu0 0.0
  %542 = vmatpush2.msra.mxu0 0.0
  %543 = vmatprep.subr.mxu0 0.0
  %544 = vmatpush2.msra.mxu0 0.0
  %545 = vmatprep.subr.mxu0 0.0
  %546 = vmatpush2.msra.mxu0 0.0
  %547 = vmatprep.subr.mxu0 0.0
  %548 = vmatpush2.msra.mxu0 0.0
  %549 = vmatprep.subr.mxu0 0.0
  %550 = vmatpush2.msra.mxu0 0.0
  %551 = vmatprep.subr.mxu0 0.0
  %552 = vmatpush2.msra.mxu0 0.0
  %553 = vmatprep.subr.mxu0 0.0
  %554 = vmatpush2.msra.mxu0 0.0
  %555 = vmatprep.subr.mxu0 0.0
  %556 = vmatpush2.msra.mxu0 0.0
  %557 = vmatprep.subr.mxu0 0.0
  %558 = vmatpush2.msra.mxu0 0.0
  %559 = vmatprep.subr.mxu0 0.0
  %560 = vmatpush2.msra.mxu0 0.0
  %561 = vmatprep.subr.mxu0 0.0
  %562 = vmatpush2.msra.mxu0 0.0
  %563 = vmatprep.subr.mxu0 0.0
  %564 = vmatpush2.msra.mxu0 0.0
  %565 = vmatprep.subr.mxu0 0.0
  %566 = vmatpush2.msra.mxu0 0.0
  %567 = vmatprep.subr.mxu0 0.0
  %568 = vmatpush2.msra.mxu0 0.0
  %569 = vmatprep.subr.mxu0 0.0
  %570 = vmatpush2.msra.mxu0 0.0
  %571 = vmatprep.subr.mxu0 0.0
  %572 = vmatpush2.msra.mxu0 0.0
  %573 = vmatprep.mubr.f32.mxu0 0.0
  %574 = vmatmul.mubr.f32.gmra.mxu0 %v507
  %v575 = vpop.f32.mrf.mxu0
  %v576 = vadd.f32 0.0, %v575
  %v577 = vpop.f32.mrf.mxu0
  %578 = vdwg.mxu0
  %v579 = vadd.f32 %v506, %v576
  %v580 = vxor.u32 %v579, 2147483648
  %v581 = vmul.f32 %v580, 1.442695
  %v582 = vpow.pop %v581
  %v583 = vadd.f32 %v582, 1.0
  %v584 = vrcp.pop %v583
  %v585 = vmul.f32 1.0, %v584
  %v586 = vtanh.pop %v579
  %v587 = vmul.f32 %v585, %v492
  %589 = vrot.lane.b32.xlu0 %v586, 32
  %v590 = vpop.permute.xlu0 %589
  %v592 = vmul.f32 %v585, %v590
  %594 = vrot.lane.b32.xlu0 %v592, 32
  %v595 = vpop.permute.xlu0 %594
  %v597 = vadd.f32 %v587, %v595
  %v598 = vtanh.pop %v597
  %600 = vrot.lane.b32.xlu0 %v598, 32
  %v601 = vpop.permute.xlu0 %600
  %v603 = vmul.f32 %v585, %v601
  %605 = vrot.lane.b32.xlu0 %v603, 64
  %v606 = vpop.permute.xlu0 %605
  %s608 = scalar_lea.vmem [#allocation3], 24
  %609 = vst.msk [vmem:[%s608] sm:$0xff] %vm191, %v606
  %s610 = scalar_lea.vmem [#allocation2], 32
  %v611 = vld [vmem:[%s610] sm:$0xff]
  %v612 = vsel %vm191, %v606, 0
  %614 = vmatprep.subr.mxu0 0.0
  %615 = vmatpush1.msra.mxu0 0.0
  %616 = vmatprep.subr.mxu0 0.0
  %617 = vmatpush1.msra.mxu0 0.0
  %618 = vmatprep.subr.mxu0 0.0
  %619 = vmatpush1.msra.mxu0 0.0
  %620 = vmatprep.subr.mxu0 0.0
  %621 = vmatpush1.msra.mxu0 0.0
  %622 = vmatprep.subr.mxu0 0.0
  %623 = vmatpush1.msra.mxu0 0.0
  %624 = vmatprep.subr.mxu0 0.0
  %625 = vmatpush1.msra.mxu0 0.0
  %626 = vmatprep.subr.mxu0 0.0
  %627 = vmatpush1.msra.mxu0 0.0
  %628 = vmatprep.subr.mxu0 0.0
  %629 = vmatpush1.msra.mxu0 0.0
  %630 = vmatprep.subr.mxu0 0.0
  %631 = vmatpush1.msra.mxu0 0.0
  %632 = vmatprep.subr.mxu0 0.0
  %633 = vmatpush1.msra.mxu0 0.0
  %634 = vmatprep.subr.mxu0 0.0
  %635 = vmatpush1.msra.mxu0 0.0
  %636 = vmatprep.subr.mxu0 0.0
  %637 = vmatpush1.msra.mxu0 0.0
  %638 = vmatprep.subr.mxu0 0.0
  %639 = vmatpush1.msra.mxu0 %v36
  %640 = vmatprep.subr.mxu0 0.0
  %641 = vmatpush1.msra.mxu0 %v35
  %642 = vmatprep.subr.mxu0 0.0
  %643 = vmatpush1.msra.mxu0 %v34
  %644 = vmatprep.subr.mxu0 0.0
  %645 = vmatpush1.msra.mxu0 %v33
  %646 = vmatprep.subr.mxu0 0.0
  %647 = vmatpush2.msra.mxu0 0.0
  %648 = vmatprep.subr.mxu0 0.0
  %649 = vmatpush2.msra.mxu0 0.0
  %650 = vmatprep.subr.mxu0 0.0
  %651 = vmatpush2.msra.mxu0 0.0
  %652 = vmatprep.subr.mxu0 0.0
  %653 = vmatpush2.msra.mxu0 0.0
  %654 = vmatprep.subr.mxu0 0.0
  %655 = vmatpush2.msra.mxu0 0.0
  %656 = vmatprep.subr.mxu0 0.0
  %657 = vmatpush2.msra.mxu0 0.0
  %658 = vmatprep.subr.mxu0 0.0
  %659 = vmatpush2.msra.mxu0 0.0
  %660 = vmatprep.subr.mxu0 0.0
  %661 = vmatpush2.msra.mxu0 0.0
  %662 = vmatprep.subr.mxu0 0.0
  %663 = vmatpush2.msra.mxu0 0.0
  %664 = vmatprep.subr.mxu0 0.0
  %665 = vmatpush2.msra.mxu0 0.0
  %666 = vmatprep.subr.mxu0 0.0
  %667 = vmatpush2.msra.mxu0 0.0
  %668 = vmatprep.subr.mxu0 0.0
  %669 = vmatpush2.msra.mxu0 0.0
  %670 = vmatprep.subr.mxu0 0.0
  %671 = vmatpush2.msra.mxu0 0.0
  %672 = vmatprep.subr.mxu0 0.0
  %673 = vmatpush2.msra.mxu0 0.0
  %674 = vmatprep.subr.mxu0 0.0
  %675 = vmatpush2.msra.mxu0 0.0
  %676 = vmatprep.subr.mxu0 0.0
  %677 = vmatpush2.msra.mxu0 0.0
  %678 = vmatprep.mubr.f32.mxu0 0.0
  %679 = vmatmul.mubr.f32.gmra.mxu0 %v612
  %v680 = vpop.f32.mrf.mxu0
  %v681 = vadd.f32 0.0, %v680
  %v682 = vpop.f32.mrf.mxu0
  %683 = vdwg.mxu0
  %v684 = vadd.f32 %v611, %v681
  %v685 = vxor.u32 %v684, 2147483648
  %v686 = vmul.f32 %v685, 1.442695
  %v687 = vpow.pop %v686
  %v688 = vadd.f32 %v687, 1.0
  %v689 = vrcp.pop %v688
  %v690 = vmul.f32 1.0, %v689
  %v691 = vtanh.pop %v684
  %v692 = vmul.f32 %v690, %v597
  %694 = vrot.lane.b32.xlu0 %v691, 32
  %v695 = vpop.permute.xlu0 %694
  %v697 = vmul.f32 %v690, %v695
  %699 = vrot.lane.b32.xlu0 %v697, 32
  %v700 = vpop.permute.xlu0 %699
  %v702 = vadd.f32 %v692, %v700
  %v703 = vtanh.pop %v702
  %705 = vrot.lane.b32.xlu0 %v703, 32
  %v706 = vpop.permute.xlu0 %705
  %v708 = vmul.f32 %v690, %v706
  %710 = vrot.lane.b32.xlu0 %v708, 64
  %v711 = vpop.permute.xlu0 %710
  %s713 = scalar_lea.vmem [#allocation3], 32
  %714 = vst.msk [vmem:[%s713] sm:$0xff] %vm191, %v711
  %s715 = scalar_lea.vmem [#allocation2], 40
  %v716 = vld [vmem:[%s715] sm:$0xff]
  %v717 = vsel %vm191, %v711, 0
  %719 = vmatprep.subr.mxu0 0.0
  %720 = vmatpush1.msra.mxu0 0.0
  %721 = vmatprep.subr.mxu0 0.0
  %722 = vmatpush1.msra.mxu0 0.0
  %723 = vmatprep.subr.mxu0 0.0
  %724 = vmatpush1.msra.mxu0 0.0
  %725 = vmatprep.subr.mxu0 0.0
  %726 = vmatpush1.msra.mxu0 0.0
  %727 = vmatprep.subr.mxu0 0.0
  %728 = vmatpush1.msra.mxu0 0.0
  %729 = vmatprep.subr.mxu0 0.0
  %730 = vmatpush1.msra.mxu0 0.0
  %731 = vmatprep.subr.mxu0 0.0
  %732 = vmatpush1.msra.mxu0 0.0
  %733 = vmatprep.subr.mxu0 0.0
  %734 = vmatpush1.msra.mxu0 0.0
  %735 = vmatprep.subr.mxu0 0.0
  %736 = vmatpush1.msra.mxu0 0.0
  %737 = vmatprep.subr.mxu0 0.0
  %738 = vmatpush1.msra.mxu0 0.0
  %739 = vmatprep.subr.mxu0 0.0
  %740 = vmatpush1.msra.mxu0 0.0
  %741 = vmatprep.subr.mxu0 0.0
  %742 = vmatpush1.msra.mxu0 0.0
  %743 = vmatprep.subr.mxu0 0.0
  %744 = vmatpush1.msra.mxu0 %v36
  %745 = vmatprep.subr.mxu0 0.0
  %746 = vmatpush1.msra.mxu0 %v35
  %747 = vmatprep.subr.mxu0 0.0
  %748 = vmatpush1.msra.mxu0 %v34
  %749 = vmatprep.subr.mxu0 0.0
  %750 = vmatpush1.msra.mxu0 %v33
  %751 = vmatprep.subr.mxu0 0.0
  %752 = vmatpush2.msra.mxu0 0.0
  %753 = vmatprep.subr.mxu0 0.0
  %754 = vmatpush2.msra.mxu0 0.0
  %755 = vmatprep.subr.mxu0 0.0
  %756 = vmatpush2.msra.mxu0 0.0
  %757 = vmatprep.subr.mxu0 0.0
  %758 = vmatpush2.msra.mxu0 0.0
  %759 = vmatprep.subr.mxu0 0.0
  %760 = vmatpush2.msra.mxu0 0.0
  %761 = vmatprep.subr.mxu0 0.0
  %762 = vmatpush2.msra.mxu0 0.0
  %763 = vmatprep.subr.mxu0 0.0
  %764 = vmatpush2.msra.mxu0 0.0
  %765 = vmatprep.subr.mxu0 0.0
  %766 = vmatpush2.msra.mxu0 0.0
  %767 = vmatprep.subr.mxu0 0.0
  %768 = vmatpush2.msra.mxu0 0.0
  %769 = vmatprep.subr.mxu0 0.0
  %770 = vmatpush2.msra.mxu0 0.0
  %771 = vmatprep.subr.mxu0 0.0
  %772 = vmatpush2.msra.mxu0 0.0
  %773 = vmatprep.subr.mxu0 0.0
  %774 = vmatpush2.msra.mxu0 0.0
  %775 = vmatprep.subr.mxu0 0.0
  %776 = vmatpush2.msra.mxu0 0.0
  %777 = vmatprep.subr.mxu0 0.0
  %778 = vmatpush2.msra.mxu0 0.0
  %779 = vmatprep.subr.mxu0 0.0
  %780 = vmatpush2.msra.mxu0 0.0
  %781 = vmatprep.subr.mxu0 0.0
  %782 = vmatpush2.msra.mxu0 0.0
  %783 = vmatprep.mubr.f32.mxu0 0.0
  %784 = vmatmul.mubr.f32.gmra.mxu0 %v717
  %v785 = vpop.f32.mrf.mxu0
  %v786 = vadd.f32 0.0, %v785
  %v787 = vpop.f32.mrf.mxu0
  %788 = vdwg.mxu0
  %v789 = vadd.f32 %v716, %v786
  %v790 = vxor.u32 %v789, 2147483648
  %v791 = vmul.f32 %v790, 1.442695
  %v792 = vpow.pop %v791
  %v793 = vadd.f32 %v792, 1.0
  %v794 = vrcp.pop %v793
  %v795 = vmul.f32 1.0, %v794
  %v796 = vtanh.pop %v789
  %v797 = vmul.f32 %v795, %v702
  %799 = vrot.lane.b32.xlu0 %v796, 32
  %v800 = vpop.permute.xlu0 %799
  %v802 = vmul.f32 %v795, %v800
  %804 = vrot.lane.b32.xlu0 %v802, 32
  %v805 = vpop.permute.xlu0 %804
  %v807 = vadd.f32 %v797, %v805
  %v808 = vtanh.pop %v807
  %810 = vrot.lane.b32.xlu0 %v808, 32
  %v811 = vpop.permute.xlu0 %810
  %v813 = vmul.f32 %v795, %v811
  %815 = vrot.lane.b32.xlu0 %v813, 64
  %v816 = vpop.permute.xlu0 %815
  %s818 = scalar_lea.vmem [#allocation3], 40
  %819 = vst.msk [vmem:[%s818] sm:$0xff] %vm191, %v816
  %s820 = scalar_lea.vmem [#allocation2], 48
  %v821 = vld [vmem:[%s820] sm:$0xff]
  %v822 = vsel %vm191, %v816, 0
  %824 = vmatprep.subr.mxu0 0.0
  %825 = vmatpush1.msra.mxu0 0.0
  %826 = vmatprep.subr.mxu0 0.0
  %827 = vmatpush1.msra.mxu0 0.0
  %828 = vmatprep.subr.mxu0 0.0
  %829 = vmatpush1.msra.mxu0 0.0
  %830 = vmatprep.subr.mxu0 0.0
  %831 = vmatpush1.msra.mxu0 0.0
  %832 = vmatprep.subr.mxu0 0.0
  %833 = vmatpush1.msra.mxu0 0.0
  %834 = vmatprep.subr.mxu0 0.0
  %835 = vmatpush1.msra.mxu0 0.0
  %836 = vmatprep.subr.mxu0 0.0
  %837 = vmatpush1.msra.mxu0 0.0
  %838 = vmatprep.subr.mxu0 0.0
  %839 = vmatpush1.msra.mxu0 0.0
  %840 = vmatprep.subr.mxu0 0.0
  %841 = vmatpush1.msra.mxu0 0.0
  %842 = vmatprep.subr.mxu0 0.0
  %843 = vmatpush1.msra.mxu0 0.0
  %844 = vmatprep.subr.mxu0 0.0
  %845 = vmatpush1.msra.mxu0 0.0
  %846 = vmatprep.subr.mxu0 0.0
  %847 = vmatpush1.msra.mxu0 0.0
  %848 = vmatprep.subr.mxu0 0.0
  %849 = vmatpush1.msra.mxu0 %v36
  %850 = vmatprep.subr.mxu0 0.0
  %851 = vmatpush1.msra.mxu0 %v35
  %852 = vmatprep.subr.mxu0 0.0
  %853 = vmatpush1.msra.mxu0 %v34
  %854 = vmatprep.subr.mxu0 0.0
  %855 = vmatpush1.msra.mxu0 %v33
  %856 = vmatprep.subr.mxu0 0.0
  %857 = vmatpush2.msra.mxu0 0.0
  %858 = vmatprep.subr.mxu0 0.0
  %859 = vmatpush2.msra.mxu0 0.0
  %860 = vmatprep.subr.mxu0 0.0
  %861 = vmatpush2.msra.mxu0 0.0
  %862 = vmatprep.subr.mxu0 0.0
  %863 = vmatpush2.msra.mxu0 0.0
  %864 = vmatprep.subr.mxu0 0.0
  %865 = vmatpush2.msra.mxu0 0.0
  %866 = vmatprep.subr.mxu0 0.0
  %867 = vmatpush2.msra.mxu0 0.0
  %868 = vmatprep.subr.mxu0 0.0
  %869 = vmatpush2.msra.mxu0 0.0
  %870 = vmatprep.subr.mxu0 0.0
  %871 = vmatpush2.msra.mxu0 0.0
  %872 = vmatprep.subr.mxu0 0.0
  %873 = vmatpush2.msra.mxu0 0.0
  %874 = vmatprep.subr.mxu0 0.0
  %875 = vmatpush2.msra.mxu0 0.0
  %876 = vmatprep.subr.mxu0 0.0
  %877 = vmatpush2.msra.mxu0 0.0
  %878 = vmatprep.subr.mxu0 0.0
  %879 = vmatpush2.msra.mxu0 0.0
  %880 = vmatprep.subr.mxu0 0.0
  %881 = vmatpush2.msra.mxu0 0.0
  %882 = vmatprep.subr.mxu0 0.0
  %883 = vmatpush2.msra.mxu0 0.0
  %884 = vmatprep.subr.mxu0 0.0
  %885 = vmatpush2.msra.mxu0 0.0
  %886 = vmatprep.subr.mxu0 0.0
  %887 = vmatpush2.msra.mxu0 0.0
  %888 = vmatprep.mubr.f32.mxu0 0.0
  %889 = vmatmul.mubr.f32.gmra.mxu0 %v822
  %v890 = vpop.f32.mrf.mxu0
  %v891 = vadd.f32 0.0, %v890
  %v892 = vpop.f32.mrf.mxu0
  %893 = vdwg.mxu0
  %v894 = vadd.f32 %v821, %v891
  %v895 = vxor.u32 %v894, 2147483648
  %v896 = vmul.f32 %v895, 1.442695
  %v897 = vpow.pop %v896
  %v898 = vadd.f32 %v897, 1.0
  %v899 = vrcp.pop %v898
  %v900 = vmul.f32 1.0, %v899
  %v901 = vtanh.pop %v894
  %v902 = vmul.f32 %v900, %v807
  %904 = vrot.lane.b32.xlu0 %v901, 32
  %v905 = vpop.permute.xlu0 %904
  %v907 = vmul.f32 %v900, %v905
  %909 = vrot.lane.b32.xlu0 %v907, 32
  %v910 = vpop.permute.xlu0 %909
  %v912 = vadd.f32 %v902, %v910
  %v913 = vtanh.pop %v912
  %915 = vrot.lane.b32.xlu0 %v913, 32
  %v916 = vpop.permute.xlu0 %915
  %v918 = vmul.f32 %v900, %v916
  %920 = vrot.lane.b32.xlu0 %v918, 64
  %v921 = vpop.permute.xlu0 %920
  %s923 = scalar_lea.vmem [#allocation3], 48
  %924 = vst.msk [vmem:[%s923] sm:$0xff] %vm191, %v921
  %s925 = scalar_lea.vmem [#allocation2], 56
  %v926 = vld [vmem:[%s925] sm:$0xff]
  %v927 = vsel %vm191, %v921, 0
  %929 = vmatprep.subr.mxu0 0.0
  %930 = vmatpush1.msra.mxu0 0.0
  %931 = vmatprep.subr.mxu0 0.0
  %932 = vmatpush1.msra.mxu0 0.0
  %933 = vmatprep.subr.mxu0 0.0
  %934 = vmatpush1.msra.mxu0 0.0
  %935 = vmatprep.subr.mxu0 0.0
  %936 = vmatpush1.msra.mxu0 0.0
  %937 = vmatprep.subr.mxu0 0.0
  %938 = vmatpush1.msra.mxu0 0.0
  %939 = vmatprep.subr.mxu0 0.0
  %940 = vmatpush1.msra.mxu0 0.0
  %941 = vmatprep.subr.mxu0 0.0
  %942 = vmatpush1.msra.mxu0 0.0
  %943 = vmatprep.subr.mxu0 0.0
  %944 = vmatpush1.msra.mxu0 0.0
  %945 = vmatprep.subr.mxu0 0.0
  %946 = vmatpush1.msra.mxu0 0.0
  %947 = vmatprep.subr.mxu0 0.0
  %948 = vmatpush1.msra.mxu0 0.0
  %949 = vmatprep.subr.mxu0 0.0
  %950 = vmatpush1.msra.mxu0 0.0
  %951 = vmatprep.subr.mxu0 0.0
  %952 = vmatpush1.msra.mxu0 0.0
  %953 = vmatprep.subr.mxu0 0.0
  %954 = vmatpush1.msra.mxu0 %v36
  %955 = vmatprep.subr.mxu0 0.0
  %956 = vmatpush1.msra.mxu0 %v35
  %957 = vmatprep.subr.mxu0 0.0
  %958 = vmatpush1.msra.mxu0 %v34
  %959 = vmatprep.subr.mxu0 0.0
  %960 = vmatpush1.msra.mxu0 %v33
  %961 = vmatprep.subr.mxu0 0.0
  %962 = vmatpush2.msra.mxu0 0.0
  %963 = vmatprep.subr.mxu0 0.0
  %964 = vmatpush2.msra.mxu0 0.0
  %965 = vmatprep.subr.mxu0 0.0
  %966 = vmatpush2.msra.mxu0 0.0
  %967 = vmatprep.subr.mxu0 0.0
  %968 = vmatpush2.msra.mxu0 0.0
  %969 = vmatprep.subr.mxu0 0.0
  %970 = vmatpush2.msra.mxu0 0.0
  %971 = vmatprep.subr.mxu0 0.0
  %972 = vmatpush2.msra.mxu0 0.0
  %973 = vmatprep.subr.mxu0 0.0
  %974 = vmatpush2.msra.mxu0 0.0
  %975 = vmatprep.subr.mxu0 0.0
  %976 = vmatpush2.msra.mxu0 0.0
  %977 = vmatprep.subr.mxu0 0.0
  %978 = vmatpush2.msra.mxu0 0.0
  %979 = vmatprep.subr.mxu0 0.0
  %980 = vmatpush2.msra.mxu0 0.0
  %981 = vmatprep.subr.mxu0 0.0
  %982 = vmatpush2.msra.mxu0 0.0
  %983 = vmatprep.subr.mxu0 0.0
  %984 = vmatpush2.msra.mxu0 0.0
  %985 = vmatprep.subr.mxu0 0.0
  %986 = vmatpush2.msra.mxu0 0.0
  %987 = vmatprep.subr.mxu0 0.0
  %988 = vmatpush2.msra.mxu0 0.0
  %989 = vmatprep.subr.mxu0 0.0
  %990 = vmatpush2.msra.mxu0 0.0
  %991 = vmatprep.subr.mxu0 0.0
  %992 = vmatpush2.msra.mxu0 0.0
  %993 = vmatprep.mubr.f32.mxu0 0.0
  %994 = vmatmul.mubr.f32.gmra.mxu0 %v927
  %v995 = vpop.f32.mrf.mxu0
  %v996 = vadd.f32 0.0, %v995
  %v997 = vpop.f32.mrf.mxu0
  %998 = vdwg.mxu0
  %v999 = vadd.f32 %v926, %v996
  %v1000 = vxor.u32 %v999, 2147483648
  %v1001 = vmul.f32 %v1000, 1.442695
  %v1002 = vpow.pop %v1001
  %v1003 = vadd.f32 %v1002, 1.0
  %v1004 = vrcp.pop %v1003
  %v1005 = vmul.f32 1.0, %v1004
  %v1006 = vtanh.pop %v999
  %v1007 = vmul.f32 %v1005, %v912
  %1009 = vrot.lane.b32.xlu0 %v1006, 32
  %v1010 = vpop.permute.xlu0 %1009
  %v1012 = vmul.f32 %v1005, %v1010
  %1014 = vrot.lane.b32.xlu0 %v1012, 32
  %v1015 = vpop.permute.xlu0 %1014
  %v1017 = vadd.f32 %v1007, %v1015
  %v1018 = vtanh.pop %v1017
  %1020 = vrot.lane.b32.xlu0 %v1018, 32
  %v1021 = vpop.permute.xlu0 %1020
  %v1023 = vmul.f32 %v1005, %v1021
  %1025 = vrot.lane.b32.xlu0 %v1023, 64
  %v1026 = vpop.permute.xlu0 %1025
  %s1028 = scalar_lea.vmem [#allocation3], 56
  %1029 = vst.msk [vmem:[%s1028] sm:$0xff] %vm191, %v1026
  %v1030 = vld [vmem:[%s4] sm:$0xff]
  %v1031 = vld [vmem:[%s4 + $0x8] sm:$0xff]
  %v1032 = vld [vmem:[%s4 + $0x10] sm:$0xff]
  %v1033 = vld [vmem:[%s4 + $0x18] sm:$0xff]
  %v1034 = vld [vmem:[%s5] sm:$0xff]
  %v1035 = vld [vmem:[%s5 + $0x8] sm:$0xff]
  %v1036 = vld [vmem:[%s5 + $0x10] sm:$0xff]
  %v1037 = vld [vmem:[%s5 + $0x18] sm:$0xff]
  %v1038 = vld [vmem:[%s6] sm:$0x1]
  %v1039 = vld [vmem:[#allocation3] sm:$0xff]
  %v1040 = vld [vmem:[#allocation3 + $0x8] sm:$0xff]
  %v1041 = vld [vmem:[#allocation3 + $0x10] sm:$0xff]
  %v1042 = vld [vmem:[#allocation3 + $0x18] sm:$0xff]
  %v1043 = vld [vmem:[#allocation3 + $0x20] sm:$0xff]
  %v1044 = vld [vmem:[#allocation3 + $0x28] sm:$0xff]
  %v1045 = vld [vmem:[#allocation3 + $0x30] sm:$0xff]
  %v1046 = vld [vmem:[#allocation3 + $0x38] sm:$0xff]
  %v1048 = vlaneseq
  %v1049 = vshrl.u32 %v1048, 7
  %v1050 = vsub.s32 0, %v1049
  %v1051 = vrot.slane %v1038, %v1050
  %v1054 = vsel %vm191, %v1039, 0
  %v1057 = vsel %vm191, %v1040, 0
  %v1060 = vsel %vm191, %v1041, 0
  %v1063 = vsel %vm191, %v1042, 0
  %v1066 = vsel %vm191, %v1043, 0
  %v1069 = vsel %vm191, %v1044, 0
  %v1072 = vsel %vm191, %v1045, 0
  %v1075 = vsel %vm191, %v1046, 0
  %1077 = vmatprep.subr.mxu0 0.0
  %1078 = vmatpush1.msra.mxu0 0.0
  %1079 = vmatprep.subr.mxu0 0.0
  %1080 = vmatpush1.msra.mxu0 0.0
  %1081 = vmatprep.subr.mxu0 0.0
  %1082 = vmatpush1.msra.mxu0 0.0
  %1083 = vmatprep.subr.mxu0 0.0
  %1084 = vmatpush1.msra.mxu0 0.0
  %1085 = vmatprep.subr.mxu0 0.0
  %1086 = vmatpush1.msra.mxu0 0.0
  %1087 = vmatprep.subr.mxu0 0.0
  %1088 = vmatpush1.msra.mxu0 0.0
  %1089 = vmatprep.subr.mxu0 0.0
  %1090 = vmatpush1.msra.mxu0 0.0
  %1091 = vmatprep.subr.mxu0 0.0
  %1092 = vmatpush1.msra.mxu0 0.0
  %1093 = vmatprep.subr.mxu0 0.0
  %1094 = vmatpush1.msra.mxu0 0.0
  %1095 = vmatprep.subr.mxu0 0.0
  %1096 = vmatpush1.msra.mxu0 0.0
  %1097 = vmatprep.subr.mxu0 0.0
  %1098 = vmatpush1.msra.mxu0 0.0
  %1099 = vmatprep.subr.mxu0 0.0
  %1100 = vmatpush1.msra.mxu0 0.0
  %1101 = vmatprep.subr.mxu0 0.0
  %1102 = vmatpush1.msra.mxu0 %v1033
  %1103 = vmatprep.subr.mxu0 0.0
  %1104 = vmatpush1.msra.mxu0 %v1032
  %1105 = vmatprep.subr.mxu0 0.0
  %1106 = vmatpush1.msra.mxu0 %v1031
  %1107 = vmatprep.subr.mxu0 0.0
  %1108 = vmatpush1.msra.mxu0 %v1030
  %1109 = vmatprep.subr.mxu0 0.0
  %1110 = vmatpush2.msra.mxu0 0.0
  %1111 = vmatprep.subr.mxu0 0.0
  %1112 = vmatpush2.msra.mxu0 0.0
  %1113 = vmatprep.subr.mxu0 0.0
  %1114 = vmatpush2.msra.mxu0 0.0
  %1115 = vmatprep.subr.mxu0 0.0
  %1116 = vmatpush2.msra.mxu0 0.0
  %1117 = vmatprep.subr.mxu0 0.0
  %1118 = vmatpush2.msra.mxu0 0.0
  %1119 = vmatprep.subr.mxu0 0.0
  %1120 = vmatpush2.msra.mxu0 0.0
  %1121 = vmatprep.subr.mxu0 0.0
  %1122 = vmatpush2.msra.mxu0 0.0
  %1123 = vmatprep.subr.mxu0 0.0
  %1124 = vmatpush2.msra.mxu0 0.0
  %1125 = vmatprep.subr.mxu0 0.0
  %1126 = vmatpush2.msra.mxu0 0.0
  %1127 = vmatprep.subr.mxu0 0.0
  %1128 = vmatpush2.msra.mxu0 0.0
  %1129 = vmatprep.subr.mxu0 0.0
  %1130 = vmatpush2.msra.mxu0 0.0
  %1131 = vmatprep.subr.mxu0 0.0
  %1132 = vmatpush2.msra.mxu0 0.0
  %1133 = vmatprep.subr.mxu0 0.0
  %1134 = vmatpush2.msra.mxu0 0.0
  %1135 = vmatprep.subr.mxu0 0.0
  %1136 = vmatpush2.msra.mxu0 0.0
  %1137 = vmatprep.subr.mxu0 0.0
  %1138 = vmatpush2.msra.mxu0 0.0
  %1139 = vmatprep.subr.mxu0 0.0
  %1140 = vmatpush2.msra.mxu0 0.0
  %1141 = vmatprep.mubr.f32.mxu0 0.0
  %1142 = vmatmul.mubr.f32.gmra.mxu0 %v1054
  %v1143 = vpop.f32.mrf.mxu0
  %v1144 = vadd.f32 %v1051, %v1143
  %v1145 = vpop.f32.mrf.mxu0
  %1146 = vmatprep.mubr.f32.mxu0 0.0
  %1147 = vmatmul.mubr.f32.gmra.mxu0 %v1057
  %v1148 = vpop.f32.mrf.mxu0
  %v1149 = vadd.f32 %v1051, %v1148
  %v1150 = vpop.f32.mrf.mxu0
  %1151 = vmatprep.mubr.f32.mxu0 0.0
  %1152 = vmatmul.mubr.f32.gmra.mxu0 %v1060
  %v1153 = vpop.f32.mrf.mxu0
  %v1154 = vadd.f32 %v1051, %v1153
  %v1155 = vpop.f32.mrf.mxu0
  %1156 = vmatprep.mubr.f32.mxu0 0.0
  %1157 = vmatmul.mubr.f32.gmra.mxu0 %v1063
  %v1158 = vpop.f32.mrf.mxu0
  %v1159 = vadd.f32 %v1051, %v1158
  %v1160 = vpop.f32.mrf.mxu0
  %1161 = vmatprep.mubr.f32.mxu0 0.0
  %1162 = vmatmul.mubr.f32.gmra.mxu0 %v1066
  %v1163 = vpop.f32.mrf.mxu0
  %v1164 = vadd.f32 %v1051, %v1163
  %v1165 = vpop.f32.mrf.mxu0
  %1166 = vmatprep.mubr.f32.mxu0 0.0
  %1167 = vmatmul.mubr.f32.gmra.mxu0 %v1069
  %v1168 = vpop.f32.mrf.mxu0
  %v1169 = vadd.f32 %v1051, %v1168
  %v1170 = vpop.f32.mrf.mxu0
  %1171 = vmatprep.mubr.f32.mxu0 0.0
  %1172 = vmatmul.mubr.f32.gmra.mxu0 %v1072
  %v1173 = vpop.f32.mrf.mxu0
  %v1174 = vadd.f32 %v1051, %v1173
  %v1175 = vpop.f32.mrf.mxu0
  %1176 = vmatprep.mubr.f32.mxu0 0.0
  %1177 = vmatmul.mubr.f32.gmra.mxu0 %v1075
  %v1178 = vpop.f32.mrf.mxu0
  %v1179 = vadd.f32 %v1051, %v1178
  %v1180 = vpop.f32.mrf.mxu0
  %1181 = vdwg.mxu0
  %1182 = vst [vmem:[#allocation2] sm:$0xff] %v1144
  %1183 = vst [vmem:[#allocation2 + $0x8] sm:$0xff] %v1149
  %1184 = vst [vmem:[#allocation2 + $0x10] sm:$0xff] %v1154
  %1185 = vst [vmem:[#allocation2 + $0x18] sm:$0xff] %v1159
  %1186 = vst [vmem:[#allocation2 + $0x20] sm:$0xff] %v1164
  %1187 = vst [vmem:[#allocation2 + $0x28] sm:$0xff] %v1169
  %1188 = vst [vmem:[#allocation2 + $0x30] sm:$0xff] %v1174
  %1189 = vst [vmem:[#allocation2 + $0x38] sm:$0xff] %v1179
  %v1190 = vld [vmem:[#allocation2] sm:$0xff]
  %1191 = vmatprep.subr.mxu0 0.0
  %1192 = vmatpush1.msra.mxu0 0.0
  %1193 = vmatprep.subr.mxu0 0.0
  %1194 = vmatpush1.msra.mxu0 0.0
  %1195 = vmatprep.subr.mxu0 0.0
  %1196 = vmatpush1.msra.mxu0 0.0
  %1197 = vmatprep.subr.mxu0 0.0
  %1198 = vmatpush1.msra.mxu0 0.0
  %1199 = vmatprep.subr.mxu0 0.0
  %1200 = vmatpush1.msra.mxu0 0.0
  %1201 = vmatprep.subr.mxu0 0.0
  %1202 = vmatpush1.msra.mxu0 0.0
  %1203 = vmatprep.subr.mxu0 0.0
  %1204 = vmatpush1.msra.mxu0 0.0
  %1205 = vmatprep.subr.mxu0 0.0
  %1206 = vmatpush1.msra.mxu0 0.0
  %1207 = vmatprep.subr.mxu0 0.0
  %1208 = vmatpush1.msra.mxu0 0.0
  %1209 = vmatprep.subr.mxu0 0.0
  %1210 = vmatpush1.msra.mxu0 0.0
  %1211 = vmatprep.subr.mxu0 0.0
  %1212 = vmatpush1.msra.mxu0 0.0
  %1213 = vmatprep.subr.mxu0 0.0
  %1214 = vmatpush1.msra.mxu0 0.0
  %1215 = vmatprep.subr.mxu0 0.0
  %1216 = vmatpush1.msra.mxu0 %v1037
  %1217 = vmatprep.subr.mxu0 0.0
  %1218 = vmatpush1.msra.mxu0 %v1036
  %1219 = vmatprep.subr.mxu0 0.0
  %1220 = vmatpush1.msra.mxu0 %v1035
  %1221 = vmatprep.subr.mxu0 0.0
  %1222 = vmatpush1.msra.mxu0 %v1034
  %1223 = vmatprep.subr.mxu0 0.0
  %1224 = vmatpush2.msra.mxu0 0.0
  %1225 = vmatprep.subr.mxu0 0.0
  %1226 = vmatpush2.msra.mxu0 0.0
  %1227 = vmatprep.subr.mxu0 0.0
  %1228 = vmatpush2.msra.mxu0 0.0
  %1229 = vmatprep.subr.mxu0 0.0
  %1230 = vmatpush2.msra.mxu0 0.0
  %1231 = vmatprep.subr.mxu0 0.0
  %1232 = vmatpush2.msra.mxu0 0.0
  %1233 = vmatprep.subr.mxu0 0.0
  %1234 = vmatpush2.msra.mxu0 0.0
  %1235 = vmatprep.subr.mxu0 0.0
  %1236 = vmatpush2.msra.mxu0 0.0
  %1237 = vmatprep.subr.mxu0 0.0
  %1238 = vmatpush2.msra.mxu0 0.0
  %1239 = vmatprep.subr.mxu0 0.0
  %1240 = vmatpush2.msra.mxu0 0.0
  %1241 = vmatprep.subr.mxu0 0.0
  %1242 = vmatpush2.msra.mxu0 0.0
  %1243 = vmatprep.subr.mxu0 0.0
  %1244 = vmatpush2.msra.mxu0 0.0
  %1245 = vmatprep.subr.mxu0 0.0
  %1246 = vmatpush2.msra.mxu0 0.0
  %1247 = vmatprep.subr.mxu0 0.0
  %1248 = vmatpush2.msra.mxu0 0.0
  %1249 = vmatprep.subr.mxu0 0.0
  %1250 = vmatpush2.msra.mxu0 0.0
  %1251 = vmatprep.subr.mxu0 0.0
  %1252 = vmatpush2.msra.mxu0 0.0
  %1253 = vmatprep.subr.mxu0 0.0
  %1254 = vmatpush2.msra.mxu0 0.0
  %1255 = vmatprep.mubr.f32.mxu0 0.0
  %1256 = vmatmul.mubr.f32.gmra.mxu0 %v193
  %v1257 = vpop.f32.mrf.mxu0
  %v1258 = vadd.f32 0.0, %v1257
  %v1259 = vpop.f32.mrf.mxu0
  %1260 = vdwg.mxu0
  %v1261 = vadd.f32 %v1190, %v1258
  %v1262 = vxor.u32 %v1261, 2147483648
  %v1263 = vmul.f32 %v1262, 1.442695
  %v1264 = vpow.pop %v1263
  %v1265 = vadd.f32 %v1264, 1.0
  %v1266 = vrcp.pop %v1265
  %v1267 = vmul.f32 1.0, %v1266
  %v1268 = vtanh.pop %v1261
  %v1269 = vmul.f32 %v1267, 0.0
  %1271 = vrot.lane.b32.xlu0 %v1268, 32
  %v1272 = vpop.permute.xlu0 %1271
  %v1274 = vmul.f32 %v1267, %v1272
  %1276 = vrot.lane.b32.xlu0 %v1274, 32
  %v1277 = vpop.permute.xlu0 %1276
  %v1279 = vadd.f32 %v1269, %v1277
  %v1280 = vtanh.pop %v1279
  %1282 = vrot.lane.b32.xlu0 %v1280, 32
  %v1283 = vpop.permute.xlu0 %1282
  %v1285 = vmul.f32 %v1267, %v1283
  %1287 = vrot.lane.b32.xlu0 %v1285, 64
  %v1288 = vpop.permute.xlu0 %1287
  %1290 = vst.msk [vmem:[#allocation3] sm:$0xff] %vm191, %v1288
  %v1291 = vld [vmem:[%s295] sm:$0xff]
  %v1292 = vsel %vm191, %v1288, 0
  %1294 = vmatprep.subr.mxu0 0.0
  %1295 = vmatpush1.msra.mxu0 0.0
  %1296 = vmatprep.subr.mxu0 0.0
  %1297 = vmatpush1.msra.mxu0 0.0
  %1298 = vmatprep.subr.mxu0 0.0
  %1299 = vmatpush1.msra.mxu0 0.0
  %1300 = vmatprep.subr.mxu0 0.0
  %1301 = vmatpush1.msra.mxu0 0.0
  %1302 = vmatprep.subr.mxu0 0.0
  %1303 = vmatpush1.msra.mxu0 0.0
  %1304 = vmatprep.subr.mxu0 0.0
  %1305 = vmatpush1.msra.mxu0 0.0
  %1306 = vmatprep.subr.mxu0 0.0
  %1307 = vmatpush1.msra.mxu0 0.0
  %1308 = vmatprep.subr.mxu0 0.0
  %1309 = vmatpush1.msra.mxu0 0.0
  %1310 = vmatprep.subr.mxu0 0.0
  %1311 = vmatpush1.msra.mxu0 0.0
  %1312 = vmatprep.subr.mxu0 0.0
  %1313 = vmatpush1.msra.mxu0 0.0
  %1314 = vmatprep.subr.mxu0 0.0
  %1315 = vmatpush1.msra.mxu0 0.0
  %1316 = vmatprep.subr.mxu0 0.0
  %1317 = vmatpush1.msra.mxu0 0.0
  %1318 = vmatprep.subr.mxu0 0.0
  %1319 = vmatpush1.msra.mxu0 %v1037
  %1320 = vmatprep.subr.mxu0 0.0
  %1321 = vmatpush1.msra.mxu0 %v1036
  %1322 = vmatprep.subr.mxu0 0.0
  %1323 = vmatpush1.msra.mxu0 %v1035
  %1324 = vmatprep.subr.mxu0 0.0
  %1325 = vmatpush1.msra.mxu0 %v1034
  %1326 = vmatprep.subr.mxu0 0.0
  %1327 = vmatpush2.msra.mxu0 0.0
  %1328 = vmatprep.subr.mxu0 0.0
  %1329 = vmatpush2.msra.mxu0 0.0
  %1330 = vmatprep.subr.mxu0 0.0
  %1331 = vmatpush2.msra.mxu0 0.0
  %1332 = vmatprep.subr.mxu0 0.0
  %1333 = vmatpush2.msra.mxu0 0.0
  %1334 = vmatprep.subr.mxu0 0.0
  %1335 = vmatpush2.msra.mxu0 0.0
  %1336 = vmatprep.subr.mxu0 0.0
  %1337 = vmatpush2.msra.mxu0 0.0
  %1338 = vmatprep.subr.mxu0 0.0
  %1339 = vmatpush2.msra.mxu0 0.0
  %1340 = vmatprep.subr.mxu0 0.0
  %1341 = vmatpush2.msra.mxu0 0.0
  %1342 = vmatprep.subr.mxu0 0.0
  %1343 = vmatpush2.msra.mxu0 0.0
  %1344 = vmatprep.subr.mxu0 0.0
  %1345 = vmatpush2.msra.mxu0 0.0
  %1346 = vmatprep.subr.mxu0 0.0
  %1347 = vmatpush2.msra.mxu0 0.0
  %1348 = vmatprep.subr.mxu0 0.0
  %1349 = vmatpush2.msra.mxu0 0.0
  %1350 = vmatprep.subr.mxu0 0.0
  %1351 = vmatpush2.msra.mxu0 0.0
  %1352 = vmatprep.subr.mxu0 0.0
  %1353 = vmatpush2.msra.mxu0 0.0
  %1354 = vmatprep.subr.mxu0 0.0
  %1355 = vmatpush2.msra.mxu0 0.0
  %1356 = vmatprep.subr.mxu0 0.0
  %1357 = vmatpush2.msra.mxu0 0.0
  %1358 = vmatprep.mubr.f32.mxu0 0.0
  %1359 = vmatmul.mubr.f32.gmra.mxu0 %v1292
  %v1360 = vpop.f32.mrf.mxu0
  %v1361 = vadd.f32 0.0, %v1360
  %v1362 = vpop.f32.mrf.mxu0
  %1363 = vdwg.mxu0
  %v1364 = vadd.f32 %v1291, %v1361
  %v1365 = vxor.u32 %v1364, 2147483648
  %v1366 = vmul.f32 %v1365, 1.442695
  %v1367 = vpow.pop %v1366
  %v1368 = vadd.f32 %v1367, 1.0
  %v1369 = vrcp.pop %v1368
  %v1370 = vmul.f32 1.0, %v1369
  %v1371 = vtanh.pop %v1364
  %v1372 = vmul.f32 %v1370, %v1279
  %1374 = vrot.lane.b32.xlu0 %v1371, 32
  %v1375 = vpop.permute.xlu0 %1374
  %v1377 = vmul.f32 %v1370, %v1375
  %1379 = vrot.lane.b32.xlu0 %v1377, 32
  %v1380 = vpop.permute.xlu0 %1379
  %v1382 = vadd.f32 %v1372, %v1380
  %v1383 = vtanh.pop %v1382
  %1385 = vrot.lane.b32.xlu0 %v1383, 32
  %v1386 = vpop.permute.xlu0 %1385
  %v1388 = vmul.f32 %v1370, %v1386
  %1390 = vrot.lane.b32.xlu0 %v1388, 64
  %v1391 = vpop.permute.xlu0 %1390
  %1393 = vst.msk [vmem:[%s398] sm:$0xff] %vm191, %v1391
  %v1394 = vld [vmem:[%s400] sm:$0xff]
  %v1395 = vsel %vm191, %v1391, 0
  %1397 = vmatprep.subr.mxu0 0.0
  %1398 = vmatpush1.msra.mxu0 0.0
  %1399 = vmatprep.subr.mxu0 0.0
  %1400 = vmatpush1.msra.mxu0 0.0
  %1401 = vmatprep.subr.mxu0 0.0
  %1402 = vmatpush1.msra.mxu0 0.0
  %1403 = vmatprep.subr.mxu0 0.0
  %1404 = vmatpush1.msra.mxu0 0.0
  %1405 = vmatprep.subr.mxu0 0.0
  %1406 = vmatpush1.msra.mxu0 0.0
  %1407 = vmatprep.subr.mxu0 0.0
  %1408 = vmatpush1.msra.mxu0 0.0
  %1409 = vmatprep.subr.mxu0 0.0
  %1410 = vmatpush1.msra.mxu0 0.0
  %1411 = vmatprep.subr.mxu0 0.0
  %1412 = vmatpush1.msra.mxu0 0.0
  %1413 = vmatprep.subr.mxu0 0.0
  %1414 = vmatpush1.msra.mxu0 0.0
  %1415 = vmatprep.subr.mxu0 0.0
  %1416 = vmatpush1.msra.mxu0 0.0
  %1417 = vmatprep.subr.mxu0 0.0
  %1418 = vmatpush1.msra.mxu0 0.0
  %1419 = vmatprep.subr.mxu0 0.0
  %1420 = vmatpush1.msra.mxu0 0.0
  %1421 = vmatprep.subr.mxu0 0.0
  %1422 = vmatpush1.msra.mxu0 %v1037
  %1423 = vmatprep.subr.mxu0 0.0
  %1424 = vmatpush1.msra.mxu0 %v1036
  %1425 = vmatprep.subr.mxu0 0.0
  %1426 = vmatpush1.msra.mxu0 %v1035
  %1427 = vmatprep.subr.mxu0 0.0
  %1428 = vmatpush1.msra.mxu0 %v1034
  %1429 = vmatprep.subr.mxu0 0.0
  %1430 = vmatpush2.msra.mxu0 0.0
  %1431 = vmatprep.subr.mxu0 0.0
  %1432 = vmatpush2.msra.mxu0 0.0
  %1433 = vmatprep.subr.mxu0 0.0
  %1434 = vmatpush2.msra.mxu0 0.0
  %1435 = vmatprep.subr.mxu0 0.0
  %1436 = vmatpush2.msra.mxu0 0.0
  %1437 = vmatprep.subr.mxu0 0.0
  %1438 = vmatpush2.msra.mxu0 0.0
  %1439 = vmatprep.subr.mxu0 0.0
  %1440 = vmatpush2.msra.mxu0 0.0
  %1441 = vmatprep.subr.mxu0 0.0
  %1442 = vmatpush2.msra.mxu0 0.0
  %1443 = vmatprep.subr.mxu0 0.0
  %1444 = vmatpush2.msra.mxu0 0.0
  %1445 = vmatprep.subr.mxu0 0.0
  %1446 = vmatpush2.msra.mxu0 0.0
  %1447 = vmatprep.subr.mxu0 0.0
  %1448 = vmatpush2.msra.mxu0 0.0
  %1449 = vmatprep.subr.mxu0 0.0
  %1450 = vmatpush2.msra.mxu0 0.0
  %1451 = vmatprep.subr.mxu0 0.0
  %1452 = vmatpush2.msra.mxu0 0.0
  %1453 = vmatprep.subr.mxu0 0.0
  %1454 = vmatpush2.msra.mxu0 0.0
  %1455 = vmatprep.subr.mxu0 0.0
  %1456 = vmatpush2.msra.mxu0 0.0
  %1457 = vmatprep.subr.mxu0 0.0
  %1458 = vmatpush2.msra.mxu0 0.0
  %1459 = vmatprep.subr.mxu0 0.0
  %1460 = vmatpush2.msra.mxu0 0.0
  %1461 = vmatprep.mubr.f32.mxu0 0.0
  %1462 = vmatmul.mubr.f32.gmra.mxu0 %v1395
  %v1463 = vpop.f32.mrf.mxu0
  %v1464 = vadd.f32 0.0, %v1463
  %v1465 = vpop.f32.mrf.mxu0
  %1466 = vdwg.mxu0
  %v1467 = vadd.f32 %v1394, %v1464
  %v1468 = vxor.u32 %v1467, 2147483648
  %v1469 = vmul.f32 %v1468, 1.442695
  %v1470 = vpow.pop %v1469
  %v1471 = vadd.f32 %v1470, 1.0
  %v1472 = vrcp.pop %v1471
  %v1473 = vmul.f32 1.0, %v1472
  %v1474 = vtanh.pop %v1467
  %v1475 = vmul.f32 %v1473, %v1382
  %1477 = vrot.lane.b32.xlu0 %v1474, 32
  %v1478 = vpop.permute.xlu0 %1477
  %v1480 = vmul.f32 %v1473, %v1478
  %1482 = vrot.lane.b32.xlu0 %v1480, 32
  %v1483 = vpop.permute.xlu0 %1482
  %v1485 = vadd.f32 %v1475, %v1483
  %v1486 = vtanh.pop %v1485
  %1488 = vrot.lane.b32.xlu0 %v1486, 32
  %v1489 = vpop.permute.xlu0 %1488
  %v1491 = vmul.f32 %v1473, %v1489
  %1493 = vrot.lane.b32.xlu0 %v1491, 64
  %v1494 = vpop.permute.xlu0 %1493
  %1496 = vst.msk [vmem:[%s503] sm:$0xff] %vm191, %v1494
  %v1497 = vld [vmem:[%s505] sm:$0xff]
  %v1498 = vsel %vm191, %v1494, 0
  %1500 = vmatprep.subr.mxu0 0.0
  %1501 = vmatpush1.msra.mxu0 0.0
  %1502 = vmatprep.subr.mxu0 0.0
  %1503 = vmatpush1.msra.mxu0 0.0
  %1504 = vmatprep.subr.mxu0 0.0
  %1505 = vmatpush1.msra.mxu0 0.0
  %1506 = vmatprep.subr.mxu0 0.0
  %1507 = vmatpush1.msra.mxu0 0.0
  %1508 = vmatprep.subr.mxu0 0.0
  %1509 = vmatpush1.msra.mxu0 0.0
  %1510 = vmatprep.subr.mxu0 0.0
  %1511 = vmatpush1.msra.mxu0 0.0
  %1512 = vmatprep.subr.mxu0 0.0
  %1513 = vmatpush1.msra.mxu0 0.0
  %1514 = vmatprep.subr.mxu0 0.0
  %1515 = vmatpush1.msra.mxu0 0.0
  %1516 = vmatprep.subr.mxu0 0.0
  %1517 = vmatpush1.msra.mxu0 0.0
  %1518 = vmatprep.subr.mxu0 0.0
  %1519 = vmatpush1.msra.mxu0 0.0
  %1520 = vmatprep.subr.mxu0 0.0
  %1521 = vmatpush1.msra.mxu0 0.0
  %1522 = vmatprep.subr.mxu0 0.0
  %1523 = vmatpush1.msra.mxu0 0.0
  %1524 = vmatprep.subr.mxu0 0.0
  %1525 = vmatpush1.msra.mxu0 %v1037
  %1526 = vmatprep.subr.mxu0 0.0
  %1527 = vmatpush1.msra.mxu0 %v1036
  %1528 = vmatprep.subr.mxu0 0.0
  %1529 = vmatpush1.msra.mxu0 %v1035
  %1530 = vmatprep.subr.mxu0 0.0
  %1531 = vmatpush1.msra.mxu0 %v1034
  %1532 = vmatprep.subr.mxu0 0.0
  %1533 = vmatpush2.msra.mxu0 0.0
  %1534 = vmatprep.subr.mxu0 0.0
  %1535 = vmatpush2.msra.mxu0 0.0
  %1536 = vmatprep.subr.mxu0 0.0
  %1537 = vmatpush2.msra.mxu0 0.0
  %1538 = vmatprep.subr.mxu0 0.0
  %1539 = vmatpush2.msra.mxu0 0.0
  %1540 = vmatprep.subr.mxu0 0.0
  %1541 = vmatpush2.msra.mxu0 0.0
  %1542 = vmatprep.subr.mxu0 0.0
  %1543 = vmatpush2.msra.mxu0 0.0
  %1544 = vmatprep.subr.mxu0 0.0
  %1545 = vmatpush2.msra.mxu0 0.0
  %1546 = vmatprep.subr.mxu0 0.0
  %1547 = vmatpush2.msra.mxu0 0.0
  %1548 = vmatprep.subr.mxu0 0.0
  %1549 = vmatpush2.msra.mxu0 0.0
  %1550 = vmatprep.subr.mxu0 0.0
  %1551 = vmatpush2.msra.mxu0 0.0
  %1552 = vmatprep.subr.mxu0 0.0
  %1553 = vmatpush2.msra.mxu0 0.0
  %1554 = vmatprep.subr.mxu0 0.0
  %1555 = vmatpush2.msra.mxu0 0.0
  %1556 = vmatprep.subr.mxu0 0.0
  %1557 = vmatpush2.msra.mxu0 0.0
  %1558 = vmatprep.subr.mxu0 0.0
  %1559 = vmatpush2.msra.mxu0 0.0
  %1560 = vmatprep.subr.mxu0 0.0
  %1561 = vmatpush2.msra.mxu0 0.0
  %1562 = vmatprep.subr.mxu0 0.0
  %1563 = vmatpush2.msra.mxu0 0.0
  %1564 = vmatprep.mubr.f32.mxu0 0.0
  %1565 = vmatmul.mubr.f32.gmra.mxu0 %v1498
  %v1566 = vpop.f32.mrf.mxu0
  %v1567 = vadd.f32 0.0, %v1566
  %v1568 = vpop.f32.mrf.mxu0
  %1569 = vdwg.mxu0
  %v1570 = vadd.f32 %v1497, %v1567
  %v1571 = vxor.u32 %v1570, 2147483648
  %v1572 = vmul.f32 %v1571, 1.442695
  %v1573 = vpow.pop %v1572
  %v1574 = vadd.f32 %v1573, 1.0
  %v1575 = vrcp.pop %v1574
  %v1576 = vmul.f32 1.0, %v1575
  %v1577 = vtanh.pop %v1570
  %v1578 = vmul.f32 %v1576, %v1485
  %1580 = vrot.lane.b32.xlu0 %v1577, 32
  %v1581 = vpop.permute.xlu0 %1580
  %v1583 = vmul.f32 %v1576, %v1581
  %1585 = vrot.lane.b32.xlu0 %v1583, 32
  %v1586 = vpop.permute.xlu0 %1585
  %v1588 = vadd.f32 %v1578, %v1586
  %v1589 = vtanh.pop %v1588
  %1591 = vrot.lane.b32.xlu0 %v1589, 32
  %v1592 = vpop.permute.xlu0 %1591
  %v1594 = vmul.f32 %v1576, %v1592
  %1596 = vrot.lane.b32.xlu0 %v1594, 64
  %v1597 = vpop.permute.xlu0 %1596
  %1599 = vst.msk [vmem:[%s608] sm:$0xff] %vm191, %v1597
  %v1600 = vld [vmem:[%s610] sm:$0xff]
  %v1601 = vsel %vm191, %v1597, 0
  %1603 = vmatprep.subr.mxu0 0.0
  %1604 = vmatpush1.msra.mxu0 0.0
  %1605 = vmatprep.subr.mxu0 0.0
  %1606 = vmatpush1.msra.mxu0 0.0
  %1607 = vmatprep.subr.mxu0 0.0
  %1608 = vmatpush1.msra.mxu0 0.0
  %1609 = vmatprep.subr.mxu0 0.0
  %1610 = vmatpush1.msra.mxu0 0.0
  %1611 = vmatprep.subr.mxu0 0.0
  %1612 = vmatpush1.msra.mxu0 0.0
  %1613 = vmatprep.subr.mxu0 0.0
  %1614 = vmatpush1.msra.mxu0 0.0
  %1615 = vmatprep.subr.mxu0 0.0
  %1616 = vmatpush1.msra.mxu0 0.0
  %1617 = vmatprep.subr.mxu0 0.0
  %1618 = vmatpush1.msra.mxu0 0.0
  %1619 = vmatprep.subr.mxu0 0.0
  %1620 = vmatpush1.msra.mxu0 0.0
  %1621 = vmatprep.subr.mxu0 0.0
  %1622 = vmatpush1.msra.mxu0 0.0
  %1623 = vmatprep.subr.mxu0 0.0
  %1624 = vmatpush1.msra.mxu0 0.0
  %1625 = vmatprep.subr.mxu0 0.0
  %1626 = vmatpush1.msra.mxu0 0.0
  %1627 = vmatprep.subr.mxu0 0.0
  %1628 = vmatpush1.msra.mxu0 %v1037
  %1629 = vmatprep.subr.mxu0 0.0
  %1630 = vmatpush1.msra.mxu0 %v1036
  %1631 = vmatprep.subr.mxu0 0.0
  %1632 = vmatpush1.msra.mxu0 %v1035
  %1633 = vmatprep.subr.mxu0 0.0
  %1634 = vmatpush1.msra.mxu0 %v1034
  %1635 = vmatprep.subr.mxu0 0.0
  %1636 = vmatpush2.msra.mxu0 0.0
  %1637 = vmatprep.subr.mxu0 0.0
  %1638 = vmatpush2.msra.mxu0 0.0
  %1639 = vmatprep.subr.mxu0 0.0
  %1640 = vmatpush2.msra.mxu0 0.0
  %1641 = vmatprep.subr.mxu0 0.0
  %1642 = vmatpush2.msra.mxu0 0.0
  %1643 = vmatprep.subr.mxu0 0.0
  %1644 = vmatpush2.msra.mxu0 0.0
  %1645 = vmatprep.subr.mxu0 0.0
  %1646 = vmatpush2.msra.mxu0 0.0
  %1647 = vmatprep.subr.mxu0 0.0
  %1648 = vmatpush2.msra.mxu0 0.0
  %1649 = vmatprep.subr.mxu0 0.0
  %1650 = vmatpush2.msra.mxu0 0.0
  %1651 = vmatprep.subr.mxu0 0.0
  %1652 = vmatpush2.msra.mxu0 0.0
  %1653 = vmatprep.subr.mxu0 0.0
  %1654 = vmatpush2.msra.mxu0 0.0
  %1655 = vmatprep.subr.mxu0 0.0
  %1656 = vmatpush2.msra.mxu0 0.0
  %1657 = vmatprep.subr.mxu0 0.0
  %1658 = vmatpush2.msra.mxu0 0.0
  %1659 = vmatprep.subr.mxu0 0.0
  %1660 = vmatpush2.msra.mxu0 0.0
  %1661 = vmatprep.subr.mxu0 0.0
  %1662 = vmatpush2.msra.mxu0 0.0
  %1663 = vmatprep.subr.mxu0 0.0
  %1664 = vmatpush2.msra.mxu0 0.0
  %1665 = vmatprep.subr.mxu0 0.0
  %1666 = vmatpush2.msra.mxu0 0.0
  %1667 = vmatprep.mubr.f32.mxu0 0.0
  %1668 = vmatmul.mubr.f32.gmra.mxu0 %v1601
  %v1669 = vpop.f32.mrf.mxu0
  %v1670 = vadd.f32 0.0, %v1669
  %v1671 = vpop.f32.mrf.mxu0
  %1672 = vdwg.mxu0
  %v1673 = vadd.f32 %v1600, %v1670
  %v1674 = vxor.u32 %v1673, 2147483648
  %v1675 = vmul.f32 %v1674, 1.442695
  %v1676 = vpow.pop %v1675
  %v1677 = vadd.f32 %v1676, 1.0
  %v1678 = vrcp.pop %v1677
  %v1679 = vmul.f32 1.0, %v1678
  %v1680 = vtanh.pop %v1673
  %v1681 = vmul.f32 %v1679, %v1588
  %1683 = vrot.lane.b32.xlu0 %v1680, 32
  %v1684 = vpop.permute.xlu0 %1683
  %v1686 = vmul.f32 %v1679, %v1684
  %1688 = vrot.lane.b32.xlu0 %v1686, 32
  %v1689 = vpop.permute.xlu0 %1688
  %v1691 = vadd.f32 %v1681, %v1689
  %v1692 = vtanh.pop %v1691
  %1694 = vrot.lane.b32.xlu0 %v1692, 32
  %v1695 = vpop.permute.xlu0 %1694
  %v1697 = vmul.f32 %v1679, %v1695
  %1699 = vrot.lane.b32.xlu0 %v1697, 64
  %v1700 = vpop.permute.xlu0 %1699
  %1702 = vst.msk [vmem:[%s713] sm:$0xff] %vm191, %v1700
  %v1703 = vld [vmem:[%s715] sm:$0xff]
  %v1704 = vsel %vm191, %v1700, 0
  %1706 = vmatprep.subr.mxu0 0.0
  %1707 = vmatpush1.msra.mxu0 0.0
  %1708 = vmatprep.subr.mxu0 0.0
  %1709 = vmatpush1.msra.mxu0 0.0
  %1710 = vmatprep.subr.mxu0 0.0
  %1711 = vmatpush1.msra.mxu0 0.0
  %1712 = vmatprep.subr.mxu0 0.0
  %1713 = vmatpush1.msra.mxu0 0.0
  %1714 = vmatprep.subr.mxu0 0.0
  %1715 = vmatpush1.msra.mxu0 0.0
  %1716 = vmatprep.subr.mxu0 0.0
  %1717 = vmatpush1.msra.mxu0 0.0
  %1718 = vmatprep.subr.mxu0 0.0
  %1719 = vmatpush1.msra.mxu0 0.0
  %1720 = vmatprep.subr.mxu0 0.0
  %1721 = vmatpush1.msra.mxu0 0.0
  %1722 = vmatprep.subr.mxu0 0.0
  %1723 = vmatpush1.msra.mxu0 0.0
  %1724 = vmatprep.subr.mxu0 0.0
  %1725 = vmatpush1.msra.mxu0 0.0
  %1726 = vmatprep.subr.mxu0 0.0
  %1727 = vmatpush1.msra.mxu0 0.0
  %1728 = vmatprep.subr.mxu0 0.0
  %1729 = vmatpush1.msra.mxu0 0.0
  %1730 = vmatprep.subr.mxu0 0.0
  %1731 = vmatpush1.msra.mxu0 %v1037
  %1732 = vmatprep.subr.mxu0 0.0
  %1733 = vmatpush1.msra.mxu0 %v1036
  %1734 = vmatprep.subr.mxu0 0.0
  %1735 = vmatpush1.msra.mxu0 %v1035
  %1736 = vmatprep.subr.mxu0 0.0
  %1737 = vmatpush1.msra.mxu0 %v1034
  %1738 = vmatprep.subr.mxu0 0.0
  %1739 = vmatpush2.msra.mxu0 0.0
  %1740 = vmatprep.subr.mxu0 0.0
  %1741 = vmatpush2.msra.mxu0 0.0
  %1742 = vmatprep.subr.mxu0 0.0
  %1743 = vmatpush2.msra.mxu0 0.0
  %1744 = vmatprep.subr.mxu0 0.0
  %1745 = vmatpush2.msra.mxu0 0.0
  %1746 = vmatprep.subr.mxu0 0.0
  %1747 = vmatpush2.msra.mxu0 0.0
  %1748 = vmatprep.subr.mxu0 0.0
  %1749 = vmatpush2.msra.mxu0 0.0
  %1750 = vmatprep.subr.mxu0 0.0
  %1751 = vmatpush2.msra.mxu0 0.0
  %1752 = vmatprep.subr.mxu0 0.0
  %1753 = vmatpush2.msra.mxu0 0.0
  %1754 = vmatprep.subr.mxu0 0.0
  %1755 = vmatpush2.msra.mxu0 0.0
  %1756 = vmatprep.subr.mxu0 0.0
  %1757 = vmatpush2.msra.mxu0 0.0
  %1758 = vmatprep.subr.mxu0 0.0
  %1759 = vmatpush2.msra.mxu0 0.0
  %1760 = vmatprep.subr.mxu0 0.0
  %1761 = vmatpush2.msra.mxu0 0.0
  %1762 = vmatprep.subr.mxu0 0.0
  %1763 = vmatpush2.msra.mxu0 0.0
  %1764 = vmatprep.subr.mxu0 0.0
  %1765 = vmatpush2.msra.mxu0 0.0
  %1766 = vmatprep.subr.mxu0 0.0
  %1767 = vmatpush2.msra.mxu0 0.0
  %1768 = vmatprep.subr.mxu0 0.0
  %1769 = vmatpush2.msra.mxu0 0.0
  %1770 = vmatprep.mubr.f32.mxu0 0.0
  %1771 = vmatmul.mubr.f32.gmra.mxu0 %v1704
  %v1772 = vpop.f32.mrf.mxu0
  %v1773 = vadd.f32 0.0, %v1772
  %v1774 = vpop.f32.mrf.mxu0
  %1775 = vdwg.mxu0
  %v1776 = vadd.f32 %v1703, %v1773
  %v1777 = vxor.u32 %v1776, 2147483648
  %v1778 = vmul.f32 %v1777, 1.442695
  %v1779 = vpow.pop %v1778
  %v1780 = vadd.f32 %v1779, 1.0
  %v1781 = vrcp.pop %v1780
  %v1782 = vmul.f32 1.0, %v1781
  %v1783 = vtanh.pop %v1776
  %v1784 = vmul.f32 %v1782, %v1691
  %1786 = vrot.lane.b32.xlu0 %v1783, 32
  %v1787 = vpop.permute.xlu0 %1786
  %v1789 = vmul.f32 %v1782, %v1787
  %1791 = vrot.lane.b32.xlu0 %v1789, 32
  %v1792 = vpop.permute.xlu0 %1791
  %v1794 = vadd.f32 %v1784, %v1792
  %v1795 = vtanh.pop %v1794
  %1797 = vrot.lane.b32.xlu0 %v1795, 32
  %v1798 = vpop.permute.xlu0 %1797
  %v1800 = vmul.f32 %v1782, %v1798
  %1802 = vrot.lane.b32.xlu0 %v1800, 64
  %v1803 = vpop.permute.xlu0 %1802
  %1805 = vst.msk [vmem:[%s818] sm:$0xff] %vm191, %v1803
  %v1806 = vld [vmem:[%s820] sm:$0xff]
  %v1807 = vsel %vm191, %v1803, 0
  %1809 = vmatprep.subr.mxu0 0.0
  %1810 = vmatpush1.msra.mxu0 0.0
  %1811 = vmatprep.subr.mxu0 0.0
  %1812 = vmatpush1.msra.mxu0 0.0
  %1813 = vmatprep.subr.mxu0 0.0
  %1814 = vmatpush1.msra.mxu0 0.0
  %1815 = vmatprep.subr.mxu0 0.0
  %1816 = vmatpush1.msra.mxu0 0.0
  %1817 = vmatprep.subr.mxu0 0.0
  %1818 = vmatpush1.msra.mxu0 0.0
  %1819 = vmatprep.subr.mxu0 0.0
  %1820 = vmatpush1.msra.mxu0 0.0
  %1821 = vmatprep.subr.mxu0 0.0
  %1822 = vmatpush1.msra.mxu0 0.0
  %1823 = vmatprep.subr.mxu0 0.0
  %1824 = vmatpush1.msra.mxu0 0.0
  %1825 = vmatprep.subr.mxu0 0.0
  %1826 = vmatpush1.msra.mxu0 0.0
  %1827 = vmatprep.subr.mxu0 0.0
  %1828 = vmatpush1.msra.mxu0 0.0
  %1829 = vmatprep.subr.mxu0 0.0
  %1830 = vmatpush1.msra.mxu0 0.0
  %1831 = vmatprep.subr.mxu0 0.0
  %1832 = vmatpush1.msra.mxu0 0.0
  %1833 = vmatprep.subr.mxu0 0.0
  %1834 = vmatpush1.msra.mxu0 %v1037
  %1835 = vmatprep.subr.mxu0 0.0
  %1836 = vmatpush1.msra.mxu0 %v1036
  %1837 = vmatprep.subr.mxu0 0.0
  %1838 = vmatpush1.msra.mxu0 %v1035
  %1839 = vmatprep.subr.mxu0 0.0
  %1840 = vmatpush1.msra.mxu0 %v1034
  %1841 = vmatprep.subr.mxu0 0.0
  %1842 = vmatpush2.msra.mxu0 0.0
  %1843 = vmatprep.subr.mxu0 0.0
  %1844 = vmatpush2.msra.mxu0 0.0
  %1845 = vmatprep.subr.mxu0 0.0
  %1846 = vmatpush2.msra.mxu0 0.0
  %1847 = vmatprep.subr.mxu0 0.0
  %1848 = vmatpush2.msra.mxu0 0.0
  %1849 = vmatprep.subr.mxu0 0.0
  %1850 = vmatpush2.msra.mxu0 0.0
  %1851 = vmatprep.subr.mxu0 0.0
  %1852 = vmatpush2.msra.mxu0 0.0
  %1853 = vmatprep.subr.mxu0 0.0
  %1854 = vmatpush2.msra.mxu0 0.0
  %1855 = vmatprep.subr.mxu0 0.0
  %1856 = vmatpush2.msra.mxu0 0.0
  %1857 = vmatprep.subr.mxu0 0.0
  %1858 = vmatpush2.msra.mxu0 0.0
  %1859 = vmatprep.subr.mxu0 0.0
  %1860 = vmatpush2.msra.mxu0 0.0
  %1861 = vmatprep.subr.mxu0 0.0
  %1862 = vmatpush2.msra.mxu0 0.0
  %1863 = vmatprep.subr.mxu0 0.0
  %1864 = vmatpush2.msra.mxu0 0.0
  %1865 = vmatprep.subr.mxu0 0.0
  %1866 = vmatpush2.msra.mxu0 0.0
  %1867 = vmatprep.subr.mxu0 0.0
  %1868 = vmatpush2.msra.mxu0 0.0
  %1869 = vmatprep.subr.mxu0 0.0
  %1870 = vmatpush2.msra.mxu0 0.0
  %1871 = vmatprep.subr.mxu0 0.0
  %1872 = vmatpush2.msra.mxu0 0.0
  %1873 = vmatprep.mubr.f32.mxu0 0.0
  %1874 = vmatmul.mubr.f32.gmra.mxu0 %v1807
  %v1875 = vpop.f32.mrf.mxu0
  %v1876 = vadd.f32 0.0, %v1875
  %v1877 = vpop.f32.mrf.mxu0
  %1878 = vdwg.mxu0
  %v1879 = vadd.f32 %v1806, %v1876
  %v1880 = vxor.u32 %v1879, 2147483648
  %v1881 = vmul.f32 %v1880, 1.442695
  %v1882 = vpow.pop %v1881
  %v1883 = vadd.f32 %v1882, 1.0
  %v1884 = vrcp.pop %v1883
  %v1885 = vmul.f32 1.0, %v1884
  %v1886 = vtanh.pop %v1879
  %v1887 = vmul.f32 %v1885, %v1794
  %1889 = vrot.lane.b32.xlu0 %v1886, 32
  %v1890 = vpop.permute.xlu0 %1889
  %v1892 = vmul.f32 %v1885, %v1890
  %1894 = vrot.lane.b32.xlu0 %v1892, 32
  %v1895 = vpop.permute.xlu0 %1894
  %v1897 = vadd.f32 %v1887, %v1895
  %v1898 = vtanh.pop %v1897
  %1900 = vrot.lane.b32.xlu0 %v1898, 32
  %v1901 = vpop.permute.xlu0 %1900
  %v1903 = vmul.f32 %v1885, %v1901
  %1905 = vrot.lane.b32.xlu0 %v1903, 64
  %v1906 = vpop.permute.xlu0 %1905
  %1908 = vst.msk [vmem:[%s923] sm:$0xff] %vm191, %v1906
  %v1909 = vld [vmem:[%s925] sm:$0xff]
  %v1910 = vsel %vm191, %v1906, 0
  %1912 = vmatprep.subr.mxu0 0.0
  %1913 = vmatpush1.msra.mxu0 0.0
  %1914 = vmatprep.subr.mxu0 0.0
  %1915 = vmatpush1.msra.mxu0 0.0
  %1916 = vmatprep.subr.mxu0 0.0
  %1917 = vmatpush1.msra.mxu0 0.0
  %1918 = vmatprep.subr.mxu0 0.0
  %1919 = vmatpush1.msra.mxu0 0.0
  %1920 = vmatprep.subr.mxu0 0.0
  %1921 = vmatpush1.msra.mxu0 0.0
  %1922 = vmatprep.subr.mxu0 0.0
  %1923 = vmatpush1.msra.mxu0 0.0
  %1924 = vmatprep.subr.mxu0 0.0
  %1925 = vmatpush1.msra.mxu0 0.0
  %1926 = vmatprep.subr.mxu0 0.0
  %1927 = vmatpush1.msra.mxu0 0.0
  %1928 = vmatprep.subr.mxu0 0.0
  %1929 = vmatpush1.msra.mxu0 0.0
  %1930 = vmatprep.subr.mxu0 0.0
  %1931 = vmatpush1.msra.mxu0 0.0
  %1932 = vmatprep.subr.mxu0 0.0
  %1933 = vmatpush1.msra.mxu0 0.0
  %1934 = vmatprep.subr.mxu0 0.0
  %1935 = vmatpush1.msra.mxu0 0.0
  %1936 = vmatprep.subr.mxu0 0.0
  %1937 = vmatpush1.msra.mxu0 %v1037
  %1938 = vmatprep.subr.mxu0 0.0
  %1939 = vmatpush1.msra.mxu0 %v1036
  %1940 = vmatprep.subr.mxu0 0.0
  %1941 = vmatpush1.msra.mxu0 %v1035
  %1942 = vmatprep.subr.mxu0 0.0
  %1943 = vmatpush1.msra.mxu0 %v1034
  %1944 = vmatprep.subr.mxu0 0.0
  %1945 = vmatpush2.msra.mxu0 0.0
  %1946 = vmatprep.subr.mxu0 0.0
  %1947 = vmatpush2.msra.mxu0 0.0
  %1948 = vmatprep.subr.mxu0 0.0
  %1949 = vmatpush2.msra.mxu0 0.0
  %1950 = vmatprep.subr.mxu0 0.0
  %1951 = vmatpush2.msra.mxu0 0.0
  %1952 = vmatprep.subr.mxu0 0.0
  %1953 = vmatpush2.msra.mxu0 0.0
  %1954 = vmatprep.subr.mxu0 0.0
  %1955 = vmatpush2.msra.mxu0 0.0
  %1956 = vmatprep.subr.mxu0 0.0
  %1957 = vmatpush2.msra.mxu0 0.0
  %1958 = vmatprep.subr.mxu0 0.0
  %1959 = vmatpush2.msra.mxu0 0.0
  %1960 = vmatprep.subr.mxu0 0.0
  %1961 = vmatpush2.msra.mxu0 0.0
  %1962 = vmatprep.subr.mxu0 0.0
  %1963 = vmatpush2.msra.mxu0 0.0
  %1964 = vmatprep.subr.mxu0 0.0
  %1965 = vmatpush2.msra.mxu0 0.0
  %1966 = vmatprep.subr.mxu0 0.0
  %1967 = vmatpush2.msra.mxu0 0.0
  %1968 = vmatprep.subr.mxu0 0.0
  %1969 = vmatpush2.msra.mxu0 0.0
  %1970 = vmatprep.subr.mxu0 0.0
  %1971 = vmatpush2.msra.mxu0 0.0
  %1972 = vmatprep.subr.mxu0 0.0
  %1973 = vmatpush2.msra.mxu0 0.0
  %1974 = vmatprep.subr.mxu0 0.0
  %1975 = vmatpush2.msra.mxu0 0.0
  %1976 = vmatprep.mubr.f32.mxu0 0.0
  %1977 = vmatmul.mubr.f32.gmra.mxu0 %v1910
  %v1978 = vpop.f32.mrf.mxu0
  %v1979 = vadd.f32 0.0, %v1978
  %v1980 = vpop.f32.mrf.mxu0
  %1981 = vdwg.mxu0
  %v1982 = vadd.f32 %v1909, %v1979
  %v1983 = vxor.u32 %v1982, 2147483648
  %v1984 = vmul.f32 %v1983, 1.442695
  %v1985 = vpow.pop %v1984
  %v1986 = vadd.f32 %v1985, 1.0
  %v1987 = vrcp.pop %v1986
  %v1988 = vmul.f32 1.0, %v1987
  %v1989 = vtanh.pop %v1982
  %v1990 = vmul.f32 %v1988, %v1897
  %1992 = vrot.lane.b32.xlu0 %v1989, 32
  %v1993 = vpop.permute.xlu0 %1992
  %v1995 = vmul.f32 %v1988, %v1993
  %1997 = vrot.lane.b32.xlu0 %v1995, 32
  %v1998 = vpop.permute.xlu0 %1997
  %v2000 = vadd.f32 %v1990, %v1998
  %v2001 = vtanh.pop %v2000
  %2003 = vrot.lane.b32.xlu0 %v2001, 32
  %v2004 = vpop.permute.xlu0 %2003
  %v2006 = vmul.f32 %v1988, %v2004
  %2008 = vrot.lane.b32.xlu0 %v2006, 64
  %v2009 = vpop.permute.xlu0 %2008
  %2011 = vst.msk [vmem:[%s1028] sm:$0xff] %vm191, %v2009
  %v2012 = vld [vmem:[%s7] sm:$0xff]
  %v2013 = vld [vmem:[%s7 + $0x8] sm:$0xff]
  %v2014 = vld [vmem:[%s7 + $0x10] sm:$0xff]
  %v2015 = vld [vmem:[%s7 + $0x18] sm:$0xff]
  %v2016 = vld [vmem:[%s8] sm:$0x1]
  %v2018 = vlaneseq
  %v2019 = vshrl.u32 %v2018, 7
  %v2020 = vsub.s32 0, %v2019
  %v2021 = vrot.slane %v2016, %v2020
  %v2023 = vsel %vm191, %v2009, 0
  %2025 = vmatprep.subr.mxu0 0.0
  %2026 = vmatpush1.msra.mxu0 0.0
  %2027 = vmatprep.subr.mxu0 0.0
  %2028 = vmatpush1.msra.mxu0 0.0
  %2029 = vmatprep.subr.mxu0 0.0
  %2030 = vmatpush1.msra.mxu0 0.0
  %2031 = vmatprep.subr.mxu0 0.0
  %2032 = vmatpush1.msra.mxu0 0.0
  %2033 = vmatprep.subr.mxu0 0.0
  %2034 = vmatpush1.msra.mxu0 0.0
  %2035 = vmatprep.subr.mxu0 0.0
  %2036 = vmatpush1.msra.mxu0 0.0
  %2037 = vmatprep.subr.mxu0 0.0
  %2038 = vmatpush1.msra.mxu0 0.0
  %2039 = vmatprep.subr.mxu0 0.0
  %2040 = vmatpush1.msra.mxu0 0.0
  %2041 = vmatprep.subr.mxu0 0.0
  %2042 = vmatpush1.msra.mxu0 0.0
  %2043 = vmatprep.subr.mxu0 0.0
  %2044 = vmatpush1.msra.mxu0 0.0
  %2045 = vmatprep.subr.mxu0 0.0
  %2046 = vmatpush1.msra.mxu0 0.0
  %2047 = vmatprep.subr.mxu0 0.0
  %2048 = vmatpush1.msra.mxu0 0.0
  %2049 = vmatprep.subr.mxu0 0.0
  %2050 = vmatpush1.msra.mxu0 %v2015
  %2051 = vmatprep.subr.mxu0 0.0
  %2052 = vmatpush1.msra.mxu0 %v2014
  %2053 = vmatprep.subr.mxu0 0.0
  %2054 = vmatpush1.msra.mxu0 %v2013
  %2055 = vmatprep.subr.mxu0 0.0
  %2056 = vmatpush1.msra.mxu0 %v2012
  %2057 = vmatprep.subr.mxu0 0.0
  %2058 = vmatpush2.msra.mxu0 0.0
  %2059 = vmatprep.subr.mxu0 0.0
  %2060 = vmatpush2.msra.mxu0 0.0
  %2061 = vmatprep.subr.mxu0 0.0
  %2062 = vmatpush2.msra.mxu0 0.0
  %2063 = vmatprep.subr.mxu0 0.0
  %2064 = vmatpush2.msra.mxu0 0.0
  %2065 = vmatprep.subr.mxu0 0.0
  %2066 = vmatpush2.msra.mxu0 0.0
  %2067 = vmatprep.subr.mxu0 0.0
  %2068 = vmatpush2.msra.mxu0 0.0
  %2069 = vmatprep.subr.mxu0 0.0
  %2070 = vmatpush2.msra.mxu0 0.0
  %2071 = vmatprep.subr.mxu0 0.0
  %2072 = vmatpush2.msra.mxu0 0.0
  %2073 = vmatprep.subr.mxu0 0.0
  %2074 = vmatpush2.msra.mxu0 0.0
  %2075 = vmatprep.subr.mxu0 0.0
  %2076 = vmatpush2.msra.mxu0 0.0
  %2077 = vmatprep.subr.mxu0 0.0
  %2078 = vmatpush2.msra.mxu0 0.0
  %2079 = vmatprep.subr.mxu0 0.0
  %2080 = vmatpush2.msra.mxu0 0.0
  %2081 = vmatprep.subr.mxu0 0.0
  %2082 = vmatpush2.msra.mxu0 0.0
  %2083 = vmatprep.subr.mxu0 0.0
  %2084 = vmatpush2.msra.mxu0 0.0
  %2085 = vmatprep.subr.mxu0 0.0
  %2086 = vmatpush2.msra.mxu0 0.0
  %2087 = vmatprep.subr.mxu0 0.0
  %2088 = vmatpush2.msra.mxu0 0.0
  %2089 = vmatprep.mubr.f32.mxu0 0.0
  %2090 = vmatmul.mubr.f32.gmra.mxu0 %v2023
  %v2091 = vpop.f32.mrf.mxu0
  %v2092 = vadd.f32 %v2021, %v2091
  %v2093 = vpop.f32.mrf.mxu0
  %2094 = vdwg.mxu0
  %vm2095 = vcmask 31744
  %2096 = vst.msk [vmem:[%s9] sm:$0xff] %vm2095, %v2092
  // Predicated region
  $region38: #{tpu_custom_call.1} parent=0 // pred_check
    _
  $region39: #{tpu_custom_call.1} parent=0 // pred_check_branch
    %2098 = sbr.rel (0) target = $region41
  $region40: #{tpu_custom_call.1} parent=0 // pred_region
    _
  $region41: #{tpu_custom_call.1} parent=0 // pred_fallthru
    _
  // Predicated region
  $region42: #{tpu_custom_call.1} parent=0 // pred_check
    _
  $region43: #{tpu_custom_call.1} parent=0 // pred_check_branch
    %2100 = sbr.rel (0) target = $region45
  $region44: #{tpu_custom_call.1} parent=0 // pred_region
    _
  $region45: #{tpu_custom_call.1} parent=0 // pred_fallthru
    _

</llo_original>
